<compile_context>
chip_gen: v5e
topology: v5e:2x2
jax: 0.10.0
libtpu: 0.0.40
codegen_flags: <defaults>
</compile_context>

<pallas_src>
import functools

import numpy as np
import jax
import jax.numpy as jnp
from jax import lax
from jax.experimental import pallas as pl
from jax.experimental.pallas import tpu as pltpu

KSIZE = 7
PAD = KSIZE // 2  # 3


def _spatial_attn_kernel(w_ref, mask_ref, x_ref, o_ref, sum_ref, max_ref,
                         *, C, CB, W, HWp):
    """Grid = (batch, channel_block).

    w_ref   : SMEM (2*K*K,)   flattened conv weights; avg half pre-scaled by 1/C
    mask_ref: VMEM (2*K, HWp) rows [0,K): column masks per kx; [K,2K): row masks per ky
    x_ref   : VMEM (CB, HWp)  channel block of the flattened input (batch squeezed)
    o_ref   : VMEM (1, HWp)   lane-dense output attention map for this batch elem
    sum_ref : VMEM (1, HWp)   running channel sum   (scratch, persists over cb)
    max_ref : VMEM (1, HWp)   running channel max   (scratch, persists over cb)
    """
    cb = pl.program_id(1)
    ncb = pl.num_programs(1)
    k2 = KSIZE * KSIZE

    # ---- reset per-batch accumulators at the first channel block ----
    @pl.when(cb == 0)
    def _init():
        sum_ref[...] = jnp.zeros_like(sum_ref)
        max_ref[...] = jnp.full_like(max_ref, -jnp.inf)

    # ---- vectorized running channel reduction (sum & max) over this block ----
    xb = x_ref[...].astype(jnp.float32)                       # (CB, HWp)
    if C % CB != 0:
        # Tail block: mask out channels past C (block reads past the array end).
        ch_idx = cb * CB + lax.broadcasted_iota(jnp.int32, (CB, 1), 0)
        valid = ch_idx < C                                     # (CB, 1) bool
        xs = jnp.where(valid, xb, 0.0)
        xm = jnp.where(valid, xb, -jnp.inf)
    else:
        xs, xm = xb, xb
    sum_ref[...] = sum_ref[...] + jnp.sum(xs, axis=0, keepdims=True)
    max_ref[...] = jnp.maximum(max_ref[...], jnp.max(xm, axis=0, keepdims=True))

    # ---- last channel block: 7x7 conv (flattened space) + sigmoid ----
    @pl.when(cb == ncb - 1)
    def _finalize():
        # avg channel = running sum (1/C folded into its weights), max channel.
        chans = (sum_ref[...], max_ref[...])

        # Column taps: per channel, 6 lane-rolled + column-masked copies (+identity).
        # cols[ci][kx][p] = colmask_kx(p) * chan_ci[(p + kx - PAD) mod HWp]
        cols = []
        for ci in range(2):
            ch_map = chans[ci]
            per_kx = []
            for kx in range(KSIZE):
                dx = kx - PAD
                if dx == 0:
                    per_kx.append(ch_map)
                else:
                    rolled = pltpu.roll(ch_map, (-dx) % HWp, 1)
                    per_kx.append(rolled * mask_ref[pl.ds(kx, 1), :])
            cols.append(per_kx)

        # Row taps: per-ky weighted sum of the 14 column taps, then one
        # row-roll (shift = (ky-PAD)*W in flat space) + row mask each.
        acc = jnp.zeros((1, HWp), jnp.float32)
        for ky in range(KSIZE):
            dy = ky - PAD
            s_ky = jnp.zeros((1, HWp), jnp.float32)
            for ci in range(2):
                for kx in range(KSIZE):
                    w = w_ref[ci * k2 + ky * KSIZE + kx]
                    s_ky = s_ky + w * cols[ci][kx]
            if dy == 0:
                acc = acc + s_ky
            else:
                rolled = pltpu.roll(s_ky, (-dy * W) % HWp, 1)
                acc = acc + rolled * mask_ref[pl.ds(KSIZE + ky, 1), :]

        o_ref[...] = jax.nn.sigmoid(acc).astype(o_ref.dtype)


def _choose_channel_block(C, HWp, itemsize, budget_bytes=4 * 1024 * 1024):
    """Channel-block size: big enough to amortize per-step overhead, small
    enough for VMEM double-buffering, and either a multiple of 8 (sublane rule)
    or the full channel dim."""
    per_channel = HWp * itemsize
    cbk = max(1, budget_bytes // per_channel)
    if cbk >= C:
        return int(C)
    cbk = max(8, (cbk // 8) * 8)
    return int(min(cbk, C))


def spatial_attention(x, weight):
    """x: [B, C, H, W], weight: [1, 2, K, K] -> [B, 1, H, W]."""
    B, C, H, W = x.shape
    HW = H * W
    HWp = ((HW + 127) // 128) * 128                    # lane-dense spatial length
    CB = _choose_channel_block(C, HWp, x.dtype.itemsize)
    NCB = pl.cdiv(C, CB)

    # Flatten spatial (free reshape for row-major NCHW); pad lanes to 128.
    x_flat = x.reshape(B, C, HW)
    if HWp != HW:
        # TODO(synk): when HW % 128 != 0 this pad copies x once in HBM; a 2D
        # row-tiled kernel with a PAD-row halo would avoid it.
        x_flat = jnp.pad(x_flat, ((0, 0), (0, 0), (0, HWp - HW)))

    # Conv weights flattened as (in_ch, ky, kx); fold 1/C of the mean into the
    # avg-channel (in_ch=0) weights so the kernel can use a raw running sum.
    w = weight.astype(jnp.float32).reshape(2, KSIZE * KSIZE)
    w = w * jnp.array([[1.0 / C], [1.0]], dtype=jnp.float32)
    w_flat = w.reshape(-1)                              # (2*K*K,)

    # Host-precomputed 0/1 validity masks for flattened-space conv taps.
    p = np.arange(HWp)
    xpos, ypos = p % W, p // W
    col = np.stack([((xpos + kx - PAD) >= 0) & ((xpos + kx - PAD) < W)
                    for kx in range(KSIZE)])
    row = np.stack([((ypos + ky - PAD) >= 0) & ((ypos + ky - PAD) < H)
                    for ky in range(KSIZE)])
    masks = jnp.asarray(np.concatenate([col, row]).astype(np.float32))  # (2K, HWp)

    kernel = functools.partial(_spatial_attn_kernel,
                               C=C, CB=CB, W=W, HWp=HWp)

    out = pl.pallas_call(
        kernel,
        out_shape=jax.ShapeDtypeStruct((B, 1, HWp), x.dtype),
        grid_spec=pltpu.PrefetchScalarGridSpec(
            num_scalar_prefetch=0,
            grid=(B, NCB),                                  # reduction axis last
            in_specs=[
                pl.BlockSpec(memory_space=pltpu.MemorySpace.SMEM),        # weights
                pl.BlockSpec((2 * KSIZE, HWp), lambda b, c: (0, 0)),      # masks
                pl.BlockSpec((None, CB, HWp), lambda b, c: (b, c, 0)),    # x block
            ],
            out_specs=pl.BlockSpec((None, 1, HWp), lambda b, c: (b, 0, 0)),
            scratch_shapes=[pltpu.VMEM((1, HWp), jnp.float32),   # running sum
                            pltpu.VMEM((1, HWp), jnp.float32)],  # running max
        ),
        compiler_params=pltpu.CompilerParams(
            dimension_semantics=("parallel", "arbitrary"),
            vmem_limit_bytes=32 * 1024 * 1024,
        ),
    )(w_flat, masks, x_flat)

    return out[:, :, :HW].reshape(B, 1, H, W)


def _reference(x, weight):
    """Plain-JAX reference matching the PyTorch module."""
    avg_out = jnp.mean(x, axis=1, keepdims=True)
    max_out = jnp.max(x, axis=1, keepdims=True)
    xc = jnp.concatenate([avg_out, max_out], axis=1)           # [B,2,H,W]
    y = lax.conv_general_dilated(
        xc, weight, window_strides=(1, 1), padding=[(PAD, PAD), (PAD, PAD)],
        dimension_numbers=("NCHW", "OIHW", "NCHW"))
    return jax.nn.sigmoid(y)


if __name__ == "__main__":
    key = jax.random.PRNGKey(0)
    k_x, k_w = jax.random.split(key)

    B, C, H, W = 2, 4, 16, 16
    x = jax.random.normal(k_x, (B, C, H, W), dtype=jnp.float32)

    # Deterministic conv weight init (kaiming-uniform-ish, fan_in = 2*7*7).
    fan_in = 2 * KSIZE * KSIZE
    bound = float(np.sqrt(1.0 / fan_in))
    weight = jax.random.uniform(k_w, (1, 2, KSIZE, KSIZE),
                                minval=-bound, maxval=bound, dtype=jnp.float32)

    out = jax.block_until_ready(spatial_attention(x, weight))
    ref = jax.block_until_ready(_reference(x, weight))

    np.testing.assert_allclose(np.asarray(out), np.asarray(ref),
                               rtol=1e-5, atol=1e-5)
    assert out.shape == (B, 1, H, W)

    print("KERNEL_OK")
</pallas_src>

<mosaic_0001>
module attributes {stable_mosaic.version = 11 : i64} {
  func.func @_spatial_attn_kernel(%arg0: i32, %arg1: i32, %arg2: memref<98xf32, #tpu.memory_space<smem>>, %arg3: memref<14x256xf32, #tpu.memory_space<vmem>>, %arg4: memref<1x4x256xf32, #tpu.memory_space<vmem>>, %arg5: memref<1x1x256xf32, #tpu.memory_space<vmem>>, %arg6: memref<1x256xf32, #tpu.memory_space<vmem>>, %arg7: memref<1x256xf32, #tpu.memory_space<vmem>>) attributes {dimension_semantics = [#tpu.dimension_semantics<parallel>, #tpu.dimension_semantics<arbitrary>], iteration_bounds = array<i64: 2, 1>, scalar_prefetch = 0 : i64, scratch_operands = 2 : i64, tpu.core_type = #tpu.core_type<tc>, window_params = [{transform_indices = @transform_0, window_bounds = array<i64: 98>}, {pipeline_mode = #tpu.pipeline_mode<synchronous>, transform_indices = @transform_1, window_bounds = array<i64: 14, 256>}, {transform_indices = @transform_2, window_bounds = array<i64: 1, 4, 256>}, {transform_indices = @transform_3, window_bounds = array<i64: 1, 1, 256>}]} {
    %c0_i32 = arith.constant 0 : i32
    %0 = arith.cmpi eq, %arg1, %c0_i32 : i32
    %1 = arith.extui %0 : i1 to i32
    %c0_i32_0 = arith.constant 0 : i32
    %2 = arith.cmpi ne, %1, %c0_i32_0 : i32
    scf.if %2 {
      %cst_14 = arith.constant 0.000000e+00 : f32
      %18 = vector.broadcast %cst_14 : f32 to vector<1x256xf32>
      %c0_15 = arith.constant 0 : index
      %c0_16 = arith.constant 0 : index
      %19 = vector.load %arg6[%c0_15, %c0_16] : memref<1x256xf32, #tpu.memory_space<vmem>>, vector<1x256xf32>
      tpu.vector_store %arg6[%c0_15, %c0_16], %18 {strides = array<i32>} : memref<1x256xf32, #tpu.memory_space<vmem>>, vector<1x256xf32>,
      %cst_17 = arith.constant 0xFF800000 : f32
      %20 = vector.broadcast %cst_17 : f32 to vector<1x256xf32>
      %c0_18 = arith.constant 0 : index
      %c0_19 = arith.constant 0 : index
      %21 = vector.load %arg7[%c0_18, %c0_19] : memref<1x256xf32, #tpu.memory_space<vmem>>, vector<1x256xf32>
      tpu.vector_store %arg7[%c0_18, %c0_19], %20 {strides = array<i32>} : memref<1x256xf32, #tpu.memory_space<vmem>>, vector<1x256xf32>,
    } else {
    }
    %c0 = arith.constant 0 : index
    %c0_1 = arith.constant 0 : index
    %c0_2 = arith.constant 0 : index
    %3 = vector.load %arg4[%c0, %c0_1, %c0_2] : memref<1x4x256xf32, #tpu.memory_space<vmem>>, vector<1x4x256xf32>
    %4 = vector.shape_cast %3 : vector<1x4x256xf32> to vector<4x256xf32>
    %c0_3 = arith.constant 0 : index
    %c0_4 = arith.constant 0 : index
    %5 = vector.load %arg6[%c0_3, %c0_4] : memref<1x256xf32, #tpu.memory_space<vmem>>, vector<1x256xf32>
    %cst = arith.constant dense<0.000000e+00> : vector<256xf32>
    %6 = vector.multi_reduction <add>, %4, %cst [0] : vector<4x256xf32> to vector<256xf32>
    %7 = vector.shape_cast %6 : vector<256xf32> to vector<1x256xf32>
    %8 = arith.addf %5, %7 : vector<1x256xf32>
    %c0_5 = arith.constant 0 : index
    %c0_6 = arith.constant 0 : index
    %9 = vector.load %arg6[%c0_5, %c0_6] : memref<1x256xf32, #tpu.memory_space<vmem>>, vector<1x256xf32>
    tpu.vector_store %arg6[%c0_5, %c0_6], %8 {strides = array<i32>} : memref<1x256xf32, #tpu.memory_space<vmem>>, vector<1x256xf32>,
    %c0_7 = arith.constant 0 : index
    %c0_8 = arith.constant 0 : index
    %10 = vector.load %arg7[%c0_7, %c0_8] : memref<1x256xf32, #tpu.memory_space<vmem>>, vector<1x256xf32>
    %cst_9 = arith.constant dense<0xFF800000> : vector<256xf32>
    %11 = vector.multi_reduction <maximumf>, %4, %cst_9 [0] : vector<4x256xf32> to vector<256xf32>
    %12 = vector.shape_cast %11 : vector<256xf32> to vector<1x256xf32>
    %13 = arith.maximumf %10, %12 : vector<1x256xf32>
    %c0_10 = arith.constant 0 : index
    %c0_11 = arith.constant 0 : index
    %14 = vector.load %arg7[%c0_10, %c0_11] : memref<1x256xf32, #tpu.memory_space<vmem>>, vector<1x256xf32>
    tpu.vector_store %arg7[%c0_10, %c0_11], %13 {strides = array<i32>} : memref<1x256xf32, #tpu.memory_space<vmem>>, vector<1x256xf32>,
    %c0_i32_12 = arith.constant 0 : i32
    %15 = arith.cmpi eq, %arg1, %c0_i32_12 : i32
    %16 = arith.extui %15 : i1 to i32
    %c0_i32_13 = arith.constant 0 : i32
    %17 = arith.cmpi ne, %16, %c0_i32_13 : i32
    scf.if %17 {
      %c0_14 = arith.constant 0 : index
      %c0_15 = arith.constant 0 : index
      %18 = vector.load %arg6[%c0_14, %c0_15] : memref<1x256xf32, #tpu.memory_space<vmem>>, vector<1x256xf32>
      %c0_16 = arith.constant 0 : index
      %c0_17 = arith.constant 0 : index
      %19 = vector.load %arg7[%c0_16, %c0_17] : memref<1x256xf32, #tpu.memory_space<vmem>>, vector<1x256xf32>
      %c3_i32 = arith.constant 3 : i32
      %20 = tpu.dynamic_rotate %18 by %c3_i32 dim 1 : vector<1x256xf32>, i32 -> vector<1x256xf32>
      %c0_18 = arith.constant 0 : index
      %c0_19 = arith.constant 0 : index
      %21 = vector.load %arg3[%c0_18, %c0_19] : memref<14x256xf32, #tpu.memory_space<vmem>>, vector<1x256xf32>
      %22 = arith.mulf %20, %21 : vector<1x256xf32>
      %c2_i32 = arith.constant 2 : i32
      %23 = tpu.dynamic_rotate %18 by %c2_i32 dim 1 : vector<1x256xf32>, i32 -> vector<1x256xf32>
      %c1 = arith.constant 1 : index
      %c0_20 = arith.constant 0 : index
      %24 = vector.load %arg3[%c1, %c0_20] : memref<14x256xf32, #tpu.memory_space<vmem>>, vector<1x256xf32>
      %25 = arith.mulf %23, %24 : vector<1x256xf32>
      %c1_i32 = arith.constant 1 : i32
      %26 = tpu.dynamic_rotate %18 by %c1_i32 dim 1 : vector<1x256xf32>, i32 -> vector<1x256xf32>
      %c2 = arith.constant 2 : index
      %c0_21 = arith.constant 0 : index
      %27 = vector.load %arg3[%c2, %c0_21] : memref<14x256xf32, #tpu.memory_space<vmem>>, vector<1x256xf32>
      %28 = arith.mulf %26, %27 : vector<1x256xf32>
      %c255_i32 = arith.constant 255 : i32
      %29 = tpu.dynamic_rotate %18 by %c255_i32 dim 1 : vector<1x256xf32>, i32 -> vector<1x256xf32>
      %c4 = arith.constant 4 : index
      %c0_22 = arith.constant 0 : index
      %30 = vector.load %arg3[%c4, %c0_22] : memref<14x256xf32, #tpu.memory_space<vmem>>, vector<1x256xf32>
      %31 = arith.mulf %29, %30 : vector<1x256xf32>
      %c254_i32 = arith.constant 254 : i32
      %32 = tpu.dynamic_rotate %18 by %c254_i32 dim 1 : vector<1x256xf32>, i32 -> vector<1x256xf32>
      %c5 = arith.constant 5 : index
      %c0_23 = arith.constant 0 : index
      %33 = vector.load %arg3[%c5, %c0_23] : memref<14x256xf32, #tpu.memory_space<vmem>>, vector<1x256xf32>
      %34 = arith.mulf %32, %33 : vector<1x256xf32>
      %c253_i32 = arith.constant 253 : i32
      %35 = tpu.dynamic_rotate %18 by %c253_i32 dim 1 : vector<1x256xf32>, i32 -> vector<1x256xf32>
      %c6 = arith.constant 6 : index
      %c0_24 = arith.constant 0 : index
      %36 = vector.load %arg3[%c6, %c0_24] : memref<14x256xf32, #tpu.memory_space<vmem>>, vector<1x256xf32>
      %37 = arith.mulf %35, %36 : vector<1x256xf32>
      %c3_i32_25 = arith.constant 3 : i32
      %38 = tpu.dynamic_rotate %19 by %c3_i32_25 dim 1 : vector<1x256xf32>, i32 -> vector<1x256xf32>
      %c0_26 = arith.constant 0 : index
      %c0_27 = arith.constant 0 : index
      %39 = vector.load %arg3[%c0_26, %c0_27] : memref<14x256xf32, #tpu.memory_space<vmem>>, vector<1x256xf32>
      %40 = arith.mulf %38, %39 : vector<1x256xf32>
      %c2_i32_28 = arith.constant 2 : i32
      %41 = tpu.dynamic_rotate %19 by %c2_i32_28 dim 1 : vector<1x256xf32>, i32 -> vector<1x256xf32>
      %c1_29 = arith.constant 1 : index
      %c0_30 = arith.constant 0 : index
      %42 = vector.load %arg3[%c1_29, %c0_30] : memref<14x256xf32, #tpu.memory_space<vmem>>, vector<1x256xf32>
      %43 = arith.mulf %41, %42 : vector<1x256xf32>
      %c1_i32_31 = arith.constant 1 : i32
      %44 = tpu.dynamic_rotate %19 by %c1_i32_31 dim 1 : vector<1x256xf32>, i32 -> vector<1x256xf32>
      %c2_32 = arith.constant 2 : index
      %c0_33 = arith.constant 0 : index
      %45 = vector.load %arg3[%c2_32, %c0_33] : memref<14x256xf32, #tpu.memory_space<vmem>>, vector<1x256xf32>
      %46 = arith.mulf %44, %45 : vector<1x256xf32>
      %c255_i32_34 = arith.constant 255 : i32
      %47 = tpu.dynamic_rotate %19 by %c255_i32_34 dim 1 : vector<1x256xf32>, i32 -> vector<1x256xf32>
      %c4_35 = arith.constant 4 : index
      %c0_36 = arith.constant 0 : index
      %48 = vector.load %arg3[%c4_35, %c0_36] : memref<14x256xf32, #tpu.memory_space<vmem>>, vector<1x256xf32>
      %49 = arith.mulf %47, %48 : vector<1x256xf32>
      %c254_i32_37 = arith.constant 254 : i32
      %50 = tpu.dynamic_rotate %19 by %c254_i32_37 dim 1 : vector<1x256xf32>, i32 -> vector<1x256xf32>
      %c5_38 = arith.constant 5 : index
      %c0_39 = arith.constant 0 : index
      %51 = vector.load %arg3[%c5_38, %c0_39] : memref<14x256xf32, #tpu.memory_space<vmem>>, vector<1x256xf32>
      %52 = arith.mulf %50, %51 : vector<1x256xf32>
      %c253_i32_40 = arith.constant 253 : i32
      %53 = tpu.dynamic_rotate %19 by %c253_i32_40 dim 1 : vector<1x256xf32>, i32 -> vector<1x256xf32>
      %c6_41 = arith.constant 6 : index
      %c0_42 = arith.constant 0 : index
      %54 = vector.load %arg3[%c6_41, %c0_42] : memref<14x256xf32, #tpu.memory_space<vmem>>, vector<1x256xf32>
      %55 = arith.mulf %53, %54 : vector<1x256xf32>
      %cst_43 = arith.constant 0.000000e+00 : f32
      %56 = vector.broadcast %cst_43 : f32 to vector<1x256xf32>
      %cst_44 = arith.constant 0.000000e+00 : f32
      %57 = vector.broadcast %cst_44 : f32 to vector<1x256xf32>
      %c0_45 = arith.constant 0 : index
      %58 = memref.load %arg2[%c0_45] : memref<98xf32, #tpu.memory_space<smem>>
      %59 = vector.broadcast %58 : f32 to vector<1x256xf32>
      %60 = arith.mulf %59, %22 : vector<1x256xf32>
      %61 = arith.addf %57, %60 : vector<1x256xf32>
      %c1_46 = arith.constant 1 : index
      %62 = memref.load %arg2[%c1_46] : memref<98xf32, #tpu.memory_space<smem>>
      %63 = vector.broadcast %62 : f32 to vector<1x256xf32>
      %64 = arith.mulf %63, %25 : vector<1x256xf32>
      %65 = arith.addf %61, %64 : vector<1x256xf32>
      %c2_47 = arith.constant 2 : index
      %66 = memref.load %arg2[%c2_47] : memref<98xf32, #tpu.memory_space<smem>>
      %67 = vector.broadcast %66 : f32 to vector<1x256xf32>
      %68 = arith.mulf %67, %28 : vector<1x256xf32>
      %69 = arith.addf %65, %68 : vector<1x256xf32>
      %c3 = arith.constant 3 : index
      %70 = memref.load %arg2[%c3] : memref<98xf32, #tpu.memory_space<smem>>
      %71 = vector.broadcast %70 : f32 to vector<1x256xf32>
      %72 = arith.mulf %71, %18 : vector<1x256xf32>
      %73 = arith.addf %69, %72 : vector<1x256xf32>
      %c4_48 = arith.constant 4 : index
      %74 = memref.load %arg2[%c4_48] : memref<98xf32, #tpu.memory_space<smem>>
      %75 = vector.broadcast %74 : f32 to vector<1x256xf32>
      %76 = arith.mulf %75, %31 : vector<1x256xf32>
      %77 = arith.addf %73, %76 : vector<1x256xf32>
      %c5_49 = arith.constant 5 : index
      %78 = memref.load %arg2[%c5_49] : memref<98xf32, #tpu.memory_space<smem>>
      %79 = vector.broadcast %78 : f32 to vector<1x256xf32>
      %80 = arith.mulf %79, %34 : vector<1x256xf32>
      %81 = arith.addf %77, %80 : vector<1x256xf32>
      %c6_50 = arith.constant 6 : index
      %82 = memref.load %arg2[%c6_50] : memref<98xf32, #tpu.memory_space<smem>>
      %83 = vector.broadcast %82 : f32 to vector<1x256xf32>
      %84 = arith.mulf %83, %37 : vector<1x256xf32>
      %85 = arith.addf %81, %84 : vector<1x256xf32>
      %c49 = arith.constant 49 : index
      %86 = memref.load %arg2[%c49] : memref<98xf32, #tpu.memory_space<smem>>
      %87 = vector.broadcast %86 : f32 to vector<1x256xf32>
      %88 = arith.mulf %87, %40 : vector<1x256xf32>
      %89 = arith.addf %85, %88 : vector<1x256xf32>
      %c50 = arith.constant 50 : index
      %90 = memref.load %arg2[%c50] : memref<98xf32, #tpu.memory_space<smem>>
      %91 = vector.broadcast %90 : f32 to vector<1x256xf32>
      %92 = arith.mulf %91, %43 : vector<1x256xf32>
      %93 = arith.addf %89, %92 : vector<1x256xf32>
      %c51 = arith.constant 51 : index
      %94 = memref.load %arg2[%c51] : memref<98xf32, #tpu.memory_space<smem>>
      %95 = vector.broadcast %94 : f32 to vector<1x256xf32>
      %96 = arith.mulf %95, %46 : vector<1x256xf32>
      %97 = arith.addf %93, %96 : vector<1x256xf32>
      %c52 = arith.constant 52 : index
      %98 = memref.load %arg2[%c52] : memref<98xf32, #tpu.memory_space<smem>>
      %99 = vector.broadcast %98 : f32 to vector<1x256xf32>
      %100 = arith.mulf %99, %19 : vector<1x256xf32>
      %101 = arith.addf %97, %100 : vector<1x256xf32>
      %c53 = arith.constant 53 : index
      %102 = memref.load %arg2[%c53] : memref<98xf32, #tpu.memory_space<smem>>
      %103 = vector.broadcast %102 : f32 to vector<1x256xf32>
      %104 = arith.mulf %103, %49 : vector<1x256xf32>
      %105 = arith.addf %101, %104 : vector<1x256xf32>
      %c54 = arith.constant 54 : index
      %106 = memref.load %arg2[%c54] : memref<98xf32, #tpu.memory_space<smem>>
      %107 = vector.broadcast %106 : f32 to vector<1x256xf32>
      %108 = arith.mulf %107, %52 : vector<1x256xf32>
      %109 = arith.addf %105, %108 : vector<1x256xf32>
      %c55 = arith.constant 55 : index
      %110 = memref.load %arg2[%c55] : memref<98xf32, #tpu.memory_space<smem>>
      %111 = vector.broadcast %110 : f32 to vector<1x256xf32>
      %112 = arith.mulf %111, %55 : vector<1x256xf32>
      %113 = arith.addf %109, %112 : vector<1x256xf32>
      %c48_i32 = arith.constant 48 : i32
      %114 = tpu.dynamic_rotate %113 by %c48_i32 dim 1 : vector<1x256xf32>, i32 -> vector<1x256xf32>
      %c7 = arith.constant 7 : index
      %c0_51 = arith.constant 0 : index
      %115 = vector.load %arg3[%c7, %c0_51] : memref<14x256xf32, #tpu.memory_space<vmem>>, vector<1x256xf32>
      %116 = arith.mulf %114, %115 : vector<1x256xf32>
      %117 = arith.addf %56, %116 : vector<1x256xf32>
      %cst_52 = arith.constant 0.000000e+00 : f32
      %118 = vector.broadcast %cst_52 : f32 to vector<1x256xf32>
      %c7_53 = arith.constant 7 : index
      %119 = memref.load %arg2[%c7_53] : memref<98xf32, #tpu.memory_space<smem>>
      %120 = vector.broadcast %119 : f32 to vector<1x256xf32>
      %121 = arith.mulf %120, %22 : vector<1x256xf32>
      %122 = arith.addf %118, %121 : vector<1x256xf32>
      %c8 = arith.constant 8 : index
      %123 = memref.load %arg2[%c8] : memref<98xf32, #tpu.memory_space<smem>>
      %124 = vector.broadcast %123 : f32 to vector<1x256xf32>
      %125 = arith.mulf %124, %25 : vector<1x256xf32>
      %126 = arith.addf %122, %125 : vector<1x256xf32>
      %c9 = arith.constant 9 : index
      %127 = memref.load %arg2[%c9] : memref<98xf32, #tpu.memory_space<smem>>
      %128 = vector.broadcast %127 : f32 to vector<1x256xf32>
      %129 = arith.mulf %128, %28 : vector<1x256xf32>
      %130 = arith.addf %126, %129 : vector<1x256xf32>
      %c10 = arith.constant 10 : index
      %131 = memref.load %arg2[%c10] : memref<98xf32, #tpu.memory_space<smem>>
      %132 = vector.broadcast %131 : f32 to vector<1x256xf32>
      %133 = arith.mulf %132, %18 : vector<1x256xf32>
      %134 = arith.addf %130, %133 : vector<1x256xf32>
      %c11 = arith.constant 11 : index
      %135 = memref.load %arg2[%c11] : memref<98xf32, #tpu.memory_space<smem>>
      %136 = vector.broadcast %135 : f32 to vector<1x256xf32>
      %137 = arith.mulf %136, %31 : vector<1x256xf32>
      %138 = arith.addf %134, %137 : vector<1x256xf32>
      %c12 = arith.constant 12 : index
      %139 = memref.load %arg2[%c12] : memref<98xf32, #tpu.memory_space<smem>>
      %140 = vector.broadcast %139 : f32 to vector<1x256xf32>
      %141 = arith.mulf %140, %34 : vector<1x256xf32>
      %142 = arith.addf %138, %141 : vector<1x256xf32>
      %c13 = arith.constant 13 : index
      %143 = memref.load %arg2[%c13] : memref<98xf32, #tpu.memory_space<smem>>
      %144 = vector.broadcast %143 : f32 to vector<1x256xf32>
      %145 = arith.mulf %144, %37 : vector<1x256xf32>
      %146 = arith.addf %142, %145 : vector<1x256xf32>
      %c56 = arith.constant 56 : index
      %147 = memref.load %arg2[%c56] : memref<98xf32, #tpu.memory_space<smem>>
      %148 = vector.broadcast %147 : f32 to vector<1x256xf32>
      %149 = arith.mulf %148, %40 : vector<1x256xf32>
      %150 = arith.addf %146, %149 : vector<1x256xf32>
      %c57 = arith.constant 57 : index
      %151 = memref.load %arg2[%c57] : memref<98xf32, #tpu.memory_space<smem>>
      %152 = vector.broadcast %151 : f32 to vector<1x256xf32>
      %153 = arith.mulf %152, %43 : vector<1x256xf32>
      %154 = arith.addf %150, %153 : vector<1x256xf32>
      %c58 = arith.constant 58 : index
      %155 = memref.load %arg2[%c58] : memref<98xf32, #tpu.memory_space<smem>>
      %156 = vector.broadcast %155 : f32 to vector<1x256xf32>
      %157 = arith.mulf %156, %46 : vector<1x256xf32>
      %158 = arith.addf %154, %157 : vector<1x256xf32>
      %c59 = arith.constant 59 : index
      %159 = memref.load %arg2[%c59] : memref<98xf32, #tpu.memory_space<smem>>
      %160 = vector.broadcast %159 : f32 to vector<1x256xf32>
      %161 = arith.mulf %160, %19 : vector<1x256xf32>
      %162 = arith.addf %158, %161 : vector<1x256xf32>
      %c60 = arith.constant 60 : index
      %163 = memref.load %arg2[%c60] : memref<98xf32, #tpu.memory_space<smem>>
      %164 = vector.broadcast %163 : f32 to vector<1x256xf32>
      %165 = arith.mulf %164, %49 : vector<1x256xf32>
      %166 = arith.addf %162, %165 : vector<1x256xf32>
      %c61 = arith.constant 61 : index
      %167 = memref.load %arg2[%c61] : memref<98xf32, #tpu.memory_space<smem>>
      %168 = vector.broadcast %167 : f32 to vector<1x256xf32>
      %169 = arith.mulf %168, %52 : vector<1x256xf32>
      %170 = arith.addf %166, %169 : vector<1x256xf32>
      %c62 = arith.constant 62 : index
      %171 = memref.load %arg2[%c62] : memref<98xf32, #tpu.memory_space<smem>>
      %172 = vector.broadcast %171 : f32 to vector<1x256xf32>
      %173 = arith.mulf %172, %55 : vector<1x256xf32>
      %174 = arith.addf %170, %173 : vector<1x256xf32>
      %c32_i32 = arith.constant 32 : i32
      %175 = tpu.dynamic_rotate %174 by %c32_i32 dim 1 : vector<1x256xf32>, i32 -> vector<1x256xf32>
      %c8_54 = arith.constant 8 : index
      %c0_55 = arith.constant 0 : index
      %176 = vector.load %arg3[%c8_54, %c0_55] : memref<14x256xf32, #tpu.memory_space<vmem>>, vector<1x256xf32>
      %177 = arith.mulf %175, %176 : vector<1x256xf32>
      %178 = arith.addf %117, %177 : vector<1x256xf32>
      %cst_56 = arith.constant 0.000000e+00 : f32
      %179 = vector.broadcast %cst_56 : f32 to vector<1x256xf32>
      %c14 = arith.constant 14 : index
      %180 = memref.load %arg2[%c14] : memref<98xf32, #tpu.memory_space<smem>>
      %181 = vector.broadcast %180 : f32 to vector<1x256xf32>
      %182 = arith.mulf %181, %22 : vector<1x256xf32>
      %183 = arith.addf %179, %182 : vector<1x256xf32>
      %c15 = arith.constant 15 : index
      %184 = memref.load %arg2[%c15] : memref<98xf32, #tpu.memory_space<smem>>
      %185 = vector.broadcast %184 : f32 to vector<1x256xf32>
      %186 = arith.mulf %185, %25 : vector<1x256xf32>
      %187 = arith.addf %183, %186 : vector<1x256xf32>
      %c16 = arith.constant 16 : index
      %188 = memref.load %arg2[%c16] : memref<98xf32, #tpu.memory_space<smem>>
      %189 = vector.broadcast %188 : f32 to vector<1x256xf32>
      %190 = arith.mulf %189, %28 : vector<1x256xf32>
      %191 = arith.addf %187, %190 : vector<1x256xf32>
      %c17 = arith.constant 17 : index
      %192 = memref.load %arg2[%c17] : memref<98xf32, #tpu.memory_space<smem>>
      %193 = vector.broadcast %192 : f32 to vector<1x256xf32>
      %194 = arith.mulf %193, %18 : vector<1x256xf32>
      %195 = arith.addf %191, %194 : vector<1x256xf32>
      %c18 = arith.constant 18 : index
      %196 = memref.load %arg2[%c18] : memref<98xf32, #tpu.memory_space<smem>>
      %197 = vector.broadcast %196 : f32 to vector<1x256xf32>
      %198 = arith.mulf %197, %31 : vector<1x256xf32>
      %199 = arith.addf %195, %198 : vector<1x256xf32>
      %c19 = arith.constant 19 : index
      %200 = memref.load %arg2[%c19] : memref<98xf32, #tpu.memory_space<smem>>
      %201 = vector.broadcast %200 : f32 to vector<1x256xf32>
      %202 = arith.mulf %201, %34 : vector<1x256xf32>
      %203 = arith.addf %199, %202 : vector<1x256xf32>
      %c20 = arith.constant 20 : index
      %204 = memref.load %arg2[%c20] : memref<98xf32, #tpu.memory_space<smem>>
      %205 = vector.broadcast %204 : f32 to vector<1x256xf32>
      %206 = arith.mulf %205, %37 : vector<1x256xf32>
      %207 = arith.addf %203, %206 : vector<1x256xf32>
      %c63 = arith.constant 63 : index
      %208 = memref.load %arg2[%c63] : memref<98xf32, #tpu.memory_space<smem>>
      %209 = vector.broadcast %208 : f32 to vector<1x256xf32>
      %210 = arith.mulf %209, %40 : vector<1x256xf32>
      %211 = arith.addf %207, %210 : vector<1x256xf32>
      %c64 = arith.constant 64 : index
      %212 = memref.load %arg2[%c64] : memref<98xf32, #tpu.memory_space<smem>>
      %213 = vector.broadcast %212 : f32 to vector<1x256xf32>
      %214 = arith.mulf %213, %43 : vector<1x256xf32>
      %215 = arith.addf %211, %214 : vector<1x256xf32>
      %c65 = arith.constant 65 : index
      %216 = memref.load %arg2[%c65] : memref<98xf32, #tpu.memory_space<smem>>
      %217 = vector.broadcast %216 : f32 to vector<1x256xf32>
      %218 = arith.mulf %217, %46 : vector<1x256xf32>
      %219 = arith.addf %215, %218 : vector<1x256xf32>
      %c66 = arith.constant 66 : index
      %220 = memref.load %arg2[%c66] : memref<98xf32, #tpu.memory_space<smem>>
      %221 = vector.broadcast %220 : f32 to vector<1x256xf32>
      %222 = arith.mulf %221, %19 : vector<1x256xf32>
      %223 = arith.addf %219, %222 : vector<1x256xf32>
      %c67 = arith.constant 67 : index
      %224 = memref.load %arg2[%c67] : memref<98xf32, #tpu.memory_space<smem>>
      %225 = vector.broadcast %224 : f32 to vector<1x256xf32>
      %226 = arith.mulf %225, %49 : vector<1x256xf32>
      %227 = arith.addf %223, %226 : vector<1x256xf32>
      %c68 = arith.constant 68 : index
      %228 = memref.load %arg2[%c68] : memref<98xf32, #tpu.memory_space<smem>>
      %229 = vector.broadcast %228 : f32 to vector<1x256xf32>
      %230 = arith.mulf %229, %52 : vector<1x256xf32>
      %231 = arith.addf %227, %230 : vector<1x256xf32>
      %c69 = arith.constant 69 : index
      %232 = memref.load %arg2[%c69] : memref<98xf32, #tpu.memory_space<smem>>
      %233 = vector.broadcast %232 : f32 to vector<1x256xf32>
      %234 = arith.mulf %233, %55 : vector<1x256xf32>
      %235 = arith.addf %231, %234 : vector<1x256xf32>
      %c16_i32 = arith.constant 16 : i32
      %236 = tpu.dynamic_rotate %235 by %c16_i32 dim 1 : vector<1x256xf32>, i32 -> vector<1x256xf32>
      %c9_57 = arith.constant 9 : index
      %c0_58 = arith.constant 0 : index
      %237 = vector.load %arg3[%c9_57, %c0_58] : memref<14x256xf32, #tpu.memory_space<vmem>>, vector<1x256xf32>
      %238 = arith.mulf %236, %237 : vector<1x256xf32>
      %239 = arith.addf %178, %238 : vector<1x256xf32>
      %cst_59 = arith.constant 0.000000e+00 : f32
      %240 = vector.broadcast %cst_59 : f32 to vector<1x256xf32>
      %c21 = arith.constant 21 : index
      %241 = memref.load %arg2[%c21] : memref<98xf32, #tpu.memory_space<smem>>
      %242 = vector.broadcast %241 : f32 to vector<1x256xf32>
      %243 = arith.mulf %242, %22 : vector<1x256xf32>
      %244 = arith.addf %240, %243 : vector<1x256xf32>
      %c22 = arith.constant 22 : index
      %245 = memref.load %arg2[%c22] : memref<98xf32, #tpu.memory_space<smem>>
      %246 = vector.broadcast %245 : f32 to vector<1x256xf32>
      %247 = arith.mulf %246, %25 : vector<1x256xf32>
      %248 = arith.addf %244, %247 : vector<1x256xf32>
      %c23 = arith.constant 23 : index
      %249 = memref.load %arg2[%c23] : memref<98xf32, #tpu.memory_space<smem>>
      %250 = vector.broadcast %249 : f32 to vector<1x256xf32>
      %251 = arith.mulf %250, %28 : vector<1x256xf32>
      %252 = arith.addf %248, %251 : vector<1x256xf32>
      %c24 = arith.constant 24 : index
      %253 = memref.load %arg2[%c24] : memref<98xf32, #tpu.memory_space<smem>>
      %254 = vector.broadcast %253 : f32 to vector<1x256xf32>
      %255 = arith.mulf %254, %18 : vector<1x256xf32>
      %256 = arith.addf %252, %255 : vector<1x256xf32>
      %c25 = arith.constant 25 : index
      %257 = memref.load %arg2[%c25] : memref<98xf32, #tpu.memory_space<smem>>
      %258 = vector.broadcast %257 : f32 to vector<1x256xf32>
      %259 = arith.mulf %258, %31 : vector<1x256xf32>
      %260 = arith.addf %256, %259 : vector<1x256xf32>
      %c26 = arith.constant 26 : index
      %261 = memref.load %arg2[%c26] : memref<98xf32, #tpu.memory_space<smem>>
      %262 = vector.broadcast %261 : f32 to vector<1x256xf32>
      %263 = arith.mulf %262, %34 : vector<1x256xf32>
      %264 = arith.addf %260, %263 : vector<1x256xf32>
      %c27 = arith.constant 27 : index
      %265 = memref.load %arg2[%c27] : memref<98xf32, #tpu.memory_space<smem>>
      %266 = vector.broadcast %265 : f32 to vector<1x256xf32>
      %267 = arith.mulf %266, %37 : vector<1x256xf32>
      %268 = arith.addf %264, %267 : vector<1x256xf32>
      %c70 = arith.constant 70 : index
      %269 = memref.load %arg2[%c70] : memref<98xf32, #tpu.memory_space<smem>>
      %270 = vector.broadcast %269 : f32 to vector<1x256xf32>
      %271 = arith.mulf %270, %40 : vector<1x256xf32>
      %272 = arith.addf %268, %271 : vector<1x256xf32>
      %c71 = arith.constant 71 : index
      %273 = memref.load %arg2[%c71] : memref<98xf32, #tpu.memory_space<smem>>
      %274 = vector.broadcast %273 : f32 to vector<1x256xf32>
      %275 = arith.mulf %274, %43 : vector<1x256xf32>
      %276 = arith.addf %272, %275 : vector<1x256xf32>
      %c72 = arith.constant 72 : index
      %277 = memref.load %arg2[%c72] : memref<98xf32, #tpu.memory_space<smem>>
      %278 = vector.broadcast %277 : f32 to vector<1x256xf32>
      %279 = arith.mulf %278, %46 : vector<1x256xf32>
      %280 = arith.addf %276, %279 : vector<1x256xf32>
      %c73 = arith.constant 73 : index
      %281 = memref.load %arg2[%c73] : memref<98xf32, #tpu.memory_space<smem>>
      %282 = vector.broadcast %281 : f32 to vector<1x256xf32>
      %283 = arith.mulf %282, %19 : vector<1x256xf32>
      %284 = arith.addf %280, %283 : vector<1x256xf32>
      %c74 = arith.constant 74 : index
      %285 = memref.load %arg2[%c74] : memref<98xf32, #tpu.memory_space<smem>>
      %286 = vector.broadcast %285 : f32 to vector<1x256xf32>
      %287 = arith.mulf %286, %49 : vector<1x256xf32>
      %288 = arith.addf %284, %287 : vector<1x256xf32>
      %c75 = arith.constant 75 : index
      %289 = memref.load %arg2[%c75] : memref<98xf32, #tpu.memory_space<smem>>
      %290 = vector.broadcast %289 : f32 to vector<1x256xf32>
      %291 = arith.mulf %290, %52 : vector<1x256xf32>
      %292 = arith.addf %288, %291 : vector<1x256xf32>
      %c76 = arith.constant 76 : index
      %293 = memref.load %arg2[%c76] : memref<98xf32, #tpu.memory_space<smem>>
      %294 = vector.broadcast %293 : f32 to vector<1x256xf32>
      %295 = arith.mulf %294, %55 : vector<1x256xf32>
      %296 = arith.addf %292, %295 : vector<1x256xf32>
      %297 = arith.addf %239, %296 : vector<1x256xf32>
      %cst_60 = arith.constant 0.000000e+00 : f32
      %298 = vector.broadcast %cst_60 : f32 to vector<1x256xf32>
      %c28 = arith.constant 28 : index
      %299 = memref.load %arg2[%c28] : memref<98xf32, #tpu.memory_space<smem>>
      %300 = vector.broadcast %299 : f32 to vector<1x256xf32>
      %301 = arith.mulf %300, %22 : vector<1x256xf32>
      %302 = arith.addf %298, %301 : vector<1x256xf32>
      %c29 = arith.constant 29 : index
      %303 = memref.load %arg2[%c29] : memref<98xf32, #tpu.memory_space<smem>>
      %304 = vector.broadcast %303 : f32 to vector<1x256xf32>
      %305 = arith.mulf %304, %25 : vector<1x256xf32>
      %306 = arith.addf %302, %305 : vector<1x256xf32>
      %c30 = arith.constant 30 : index
      %307 = memref.load %arg2[%c30] : memref<98xf32, #tpu.memory_space<smem>>
      %308 = vector.broadcast %307 : f32 to vector<1x256xf32>
      %309 = arith.mulf %308, %28 : vector<1x256xf32>
      %310 = arith.addf %306, %309 : vector<1x256xf32>
      %c31 = arith.constant 31 : index
      %311 = memref.load %arg2[%c31] : memref<98xf32, #tpu.memory_space<smem>>
      %312 = vector.broadcast %311 : f32 to vector<1x256xf32>
      %313 = arith.mulf %312, %18 : vector<1x256xf32>
      %314 = arith.addf %310, %313 : vector<1x256xf32>
      %c32 = arith.constant 32 : index
      %315 = memref.load %arg2[%c32] : memref<98xf32, #tpu.memory_space<smem>>
      %316 = vector.broadcast %315 : f32 to vector<1x256xf32>
      %317 = arith.mulf %316, %31 : vector<1x256xf32>
      %318 = arith.addf %314, %317 : vector<1x256xf32>
      %c33 = arith.constant 33 : index
      %319 = memref.load %arg2[%c33] : memref<98xf32, #tpu.memory_space<smem>>
      %320 = vector.broadcast %319 : f32 to vector<1x256xf32>
      %321 = arith.mulf %320, %34 : vector<1x256xf32>
      %322 = arith.addf %318, %321 : vector<1x256xf32>
      %c34 = arith.constant 34 : index
      %323 = memref.load %arg2[%c34] : memref<98xf32, #tpu.memory_space<smem>>
      %324 = vector.broadcast %323 : f32 to vector<1x256xf32>
      %325 = arith.mulf %324, %37 : vector<1x256xf32>
      %326 = arith.addf %322, %325 : vector<1x256xf32>
      %c77 = arith.constant 77 : index
      %327 = memref.load %arg2[%c77] : memref<98xf32, #tpu.memory_space<smem>>
      %328 = vector.broadcast %327 : f32 to vector<1x256xf32>
      %329 = arith.mulf %328, %40 : vector<1x256xf32>
      %330 = arith.addf %326, %329 : vector<1x256xf32>
      %c78 = arith.constant 78 : index
      %331 = memref.load %arg2[%c78] : memref<98xf32, #tpu.memory_space<smem>>
      %332 = vector.broadcast %331 : f32 to vector<1x256xf32>
      %333 = arith.mulf %332, %43 : vector<1x256xf32>
      %334 = arith.addf %330, %333 : vector<1x256xf32>
      %c79 = arith.constant 79 : index
      %335 = memref.load %arg2[%c79] : memref<98xf32, #tpu.memory_space<smem>>
      %336 = vector.broadcast %335 : f32 to vector<1x256xf32>
      %337 = arith.mulf %336, %46 : vector<1x256xf32>
      %338 = arith.addf %334, %337 : vector<1x256xf32>
      %c80 = arith.constant 80 : index
      %339 = memref.load %arg2[%c80] : memref<98xf32, #tpu.memory_space<smem>>
      %340 = vector.broadcast %339 : f32 to vector<1x256xf32>
      %341 = arith.mulf %340, %19 : vector<1x256xf32>
      %342 = arith.addf %338, %341 : vector<1x256xf32>
      %c81 = arith.constant 81 : index
      %343 = memref.load %arg2[%c81] : memref<98xf32, #tpu.memory_space<smem>>
      %344 = vector.broadcast %343 : f32 to vector<1x256xf32>
      %345 = arith.mulf %344, %49 : vector<1x256xf32>
      %346 = arith.addf %342, %345 : vector<1x256xf32>
      %c82 = arith.constant 82 : index
      %347 = memref.load %arg2[%c82] : memref<98xf32, #tpu.memory_space<smem>>
      %348 = vector.broadcast %347 : f32 to vector<1x256xf32>
      %349 = arith.mulf %348, %52 : vector<1x256xf32>
      %350 = arith.addf %346, %349 : vector<1x256xf32>
      %c83 = arith.constant 83 : index
      %351 = memref.load %arg2[%c83] : memref<98xf32, #tpu.memory_space<smem>>
      %352 = vector.broadcast %351 : f32 to vector<1x256xf32>
      %353 = arith.mulf %352, %55 : vector<1x256xf32>
      %354 = arith.addf %350, %353 : vector<1x256xf32>
      %c240_i32 = arith.constant 240 : i32
      %355 = tpu.dynamic_rotate %354 by %c240_i32 dim 1 : vector<1x256xf32>, i32 -> vector<1x256xf32>
      %c11_61 = arith.constant 11 : index
      %c0_62 = arith.constant 0 : index
      %356 = vector.load %arg3[%c11_61, %c0_62] : memref<14x256xf32, #tpu.memory_space<vmem>>, vector<1x256xf32>
      %357 = arith.mulf %355, %356 : vector<1x256xf32>
      %358 = arith.addf %297, %357 : vector<1x256xf32>
      %cst_63 = arith.constant 0.000000e+00 : f32
      %359 = vector.broadcast %cst_63 : f32 to vector<1x256xf32>
      %c35 = arith.constant 35 : index
      %360 = memref.load %arg2[%c35] : memref<98xf32, #tpu.memory_space<smem>>
      %361 = vector.broadcast %360 : f32 to vector<1x256xf32>
      %362 = arith.mulf %361, %22 : vector<1x256xf32>
      %363 = arith.addf %359, %362 : vector<1x256xf32>
      %c36 = arith.constant 36 : index
      %364 = memref.load %arg2[%c36] : memref<98xf32, #tpu.memory_space<smem>>
      %365 = vector.broadcast %364 : f32 to vector<1x256xf32>
      %366 = arith.mulf %365, %25 : vector<1x256xf32>
      %367 = arith.addf %363, %366 : vector<1x256xf32>
      %c37 = arith.constant 37 : index
      %368 = memref.load %arg2[%c37] : memref<98xf32, #tpu.memory_space<smem>>
      %369 = vector.broadcast %368 : f32 to vector<1x256xf32>
      %370 = arith.mulf %369, %28 : vector<1x256xf32>
      %371 = arith.addf %367, %370 : vector<1x256xf32>
      %c38 = arith.constant 38 : index
      %372 = memref.load %arg2[%c38] : memref<98xf32, #tpu.memory_space<smem>>
      %373 = vector.broadcast %372 : f32 to vector<1x256xf32>
      %374 = arith.mulf %373, %18 : vector<1x256xf32>
      %375 = arith.addf %371, %374 : vector<1x256xf32>
      %c39 = arith.constant 39 : index
      %376 = memref.load %arg2[%c39] : memref<98xf32, #tpu.memory_space<smem>>
      %377 = vector.broadcast %376 : f32 to vector<1x256xf32>
      %378 = arith.mulf %377, %31 : vector<1x256xf32>
      %379 = arith.addf %375, %378 : vector<1x256xf32>
      %c40 = arith.constant 40 : index
      %380 = memref.load %arg2[%c40] : memref<98xf32, #tpu.memory_space<smem>>
      %381 = vector.broadcast %380 : f32 to vector<1x256xf32>
      %382 = arith.mulf %381, %34 : vector<1x256xf32>
      %383 = arith.addf %379, %382 : vector<1x256xf32>
      %c41 = arith.constant 41 : index
      %384 = memref.load %arg2[%c41] : memref<98xf32, #tpu.memory_space<smem>>
      %385 = vector.broadcast %384 : f32 to vector<1x256xf32>
      %386 = arith.mulf %385, %37 : vector<1x256xf32>
      %387 = arith.addf %383, %386 : vector<1x256xf32>
      %c84 = arith.constant 84 : index
      %388 = memref.load %arg2[%c84] : memref<98xf32, #tpu.memory_space<smem>>
      %389 = vector.broadcast %388 : f32 to vector<1x256xf32>
      %390 = arith.mulf %389, %40 : vector<1x256xf32>
      %391 = arith.addf %387, %390 : vector<1x256xf32>
      %c85 = arith.constant 85 : index
      %392 = memref.load %arg2[%c85] : memref<98xf32, #tpu.memory_space<smem>>
      %393 = vector.broadcast %392 : f32 to vector<1x256xf32>
      %394 = arith.mulf %393, %43 : vector<1x256xf32>
      %395 = arith.addf %391, %394 : vector<1x256xf32>
      %c86 = arith.constant 86 : index
      %396 = memref.load %arg2[%c86] : memref<98xf32, #tpu.memory_space<smem>>
      %397 = vector.broadcast %396 : f32 to vector<1x256xf32>
      %398 = arith.mulf %397, %46 : vector<1x256xf32>
      %399 = arith.addf %395, %398 : vector<1x256xf32>
      %c87 = arith.constant 87 : index
      %400 = memref.load %arg2[%c87] : memref<98xf32, #tpu.memory_space<smem>>
      %401 = vector.broadcast %400 : f32 to vector<1x256xf32>
      %402 = arith.mulf %401, %19 : vector<1x256xf32>
      %403 = arith.addf %399, %402 : vector<1x256xf32>
      %c88 = arith.constant 88 : index
      %404 = memref.load %arg2[%c88] : memref<98xf32, #tpu.memory_space<smem>>
      %405 = vector.broadcast %404 : f32 to vector<1x256xf32>
      %406 = arith.mulf %405, %49 : vector<1x256xf32>
      %407 = arith.addf %403, %406 : vector<1x256xf32>
      %c89 = arith.constant 89 : index
      %408 = memref.load %arg2[%c89] : memref<98xf32, #tpu.memory_space<smem>>
      %409 = vector.broadcast %408 : f32 to vector<1x256xf32>
      %410 = arith.mulf %409, %52 : vector<1x256xf32>
      %411 = arith.addf %407, %410 : vector<1x256xf32>
      %c90 = arith.constant 90 : index
      %412 = memref.load %arg2[%c90] : memref<98xf32, #tpu.memory_space<smem>>
      %413 = vector.broadcast %412 : f32 to vector<1x256xf32>
      %414 = arith.mulf %413, %55 : vector<1x256xf32>
      %415 = arith.addf %411, %414 : vector<1x256xf32>
      %c224_i32 = arith.constant 224 : i32
      %416 = tpu.dynamic_rotate %415 by %c224_i32 dim 1 : vector<1x256xf32>, i32 -> vector<1x256xf32>
      %c12_64 = arith.constant 12 : index
      %c0_65 = arith.constant 0 : index
      %417 = vector.load %arg3[%c12_64, %c0_65] : memref<14x256xf32, #tpu.memory_space<vmem>>, vector<1x256xf32>
      %418 = arith.mulf %416, %417 : vector<1x256xf32>
      %419 = arith.addf %358, %418 : vector<1x256xf32>
      %cst_66 = arith.constant 0.000000e+00 : f32
      %420 = vector.broadcast %cst_66 : f32 to vector<1x256xf32>
      %c42 = arith.constant 42 : index
      %421 = memref.load %arg2[%c42] : memref<98xf32, #tpu.memory_space<smem>>
      %422 = vector.broadcast %421 : f32 to vector<1x256xf32>
      %423 = arith.mulf %422, %22 : vector<1x256xf32>
      %424 = arith.addf %420, %423 : vector<1x256xf32>
      %c43 = arith.constant 43 : index
      %425 = memref.load %arg2[%c43] : memref<98xf32, #tpu.memory_space<smem>>
      %426 = vector.broadcast %425 : f32 to vector<1x256xf32>
      %427 = arith.mulf %426, %25 : vector<1x256xf32>
      %428 = arith.addf %424, %427 : vector<1x256xf32>
      %c44 = arith.constant 44 : index
      %429 = memref.load %arg2[%c44] : memref<98xf32, #tpu.memory_space<smem>>
      %430 = vector.broadcast %429 : f32 to vector<1x256xf32>
      %431 = arith.mulf %430, %28 : vector<1x256xf32>
      %432 = arith.addf %428, %431 : vector<1x256xf32>
      %c45 = arith.constant 45 : index
      %433 = memref.load %arg2[%c45] : memref<98xf32, #tpu.memory_space<smem>>
      %434 = vector.broadcast %433 : f32 to vector<1x256xf32>
      %435 = arith.mulf %434, %18 : vector<1x256xf32>
      %436 = arith.addf %432, %435 : vector<1x256xf32>
      %c46 = arith.constant 46 : index
      %437 = memref.load %arg2[%c46] : memref<98xf32, #tpu.memory_space<smem>>
      %438 = vector.broadcast %437 : f32 to vector<1x256xf32>
      %439 = arith.mulf %438, %31 : vector<1x256xf32>
      %440 = arith.addf %436, %439 : vector<1x256xf32>
      %c47 = arith.constant 47 : index
      %441 = memref.load %arg2[%c47] : memref<98xf32, #tpu.memory_space<smem>>
      %442 = vector.broadcast %441 : f32 to vector<1x256xf32>
      %443 = arith.mulf %442, %34 : vector<1x256xf32>
      %444 = arith.addf %440, %443 : vector<1x256xf32>
      %c48 = arith.constant 48 : index
      %445 = memref.load %arg2[%c48] : memref<98xf32, #tpu.memory_space<smem>>
      %446 = vector.broadcast %445 : f32 to vector<1x256xf32>
      %447 = arith.mulf %446, %37 : vector<1x256xf32>
      %448 = arith.addf %444, %447 : vector<1x256xf32>
      %c91 = arith.constant 91 : index
      %449 = memref.load %arg2[%c91] : memref<98xf32, #tpu.memory_space<smem>>
      %450 = vector.broadcast %449 : f32 to vector<1x256xf32>
      %451 = arith.mulf %450, %40 : vector<1x256xf32>
      %452 = arith.addf %448, %451 : vector<1x256xf32>
      %c92 = arith.constant 92 : index
      %453 = memref.load %arg2[%c92] : memref<98xf32, #tpu.memory_space<smem>>
      %454 = vector.broadcast %453 : f32 to vector<1x256xf32>
      %455 = arith.mulf %454, %43 : vector<1x256xf32>
      %456 = arith.addf %452, %455 : vector<1x256xf32>
      %c93 = arith.constant 93 : index
      %457 = memref.load %arg2[%c93] : memref<98xf32, #tpu.memory_space<smem>>
      %458 = vector.broadcast %457 : f32 to vector<1x256xf32>
      %459 = arith.mulf %458, %46 : vector<1x256xf32>
      %460 = arith.addf %456, %459 : vector<1x256xf32>
      %c94 = arith.constant 94 : index
      %461 = memref.load %arg2[%c94] : memref<98xf32, #tpu.memory_space<smem>>
      %462 = vector.broadcast %461 : f32 to vector<1x256xf32>
      %463 = arith.mulf %462, %19 : vector<1x256xf32>
      %464 = arith.addf %460, %463 : vector<1x256xf32>
      %c95 = arith.constant 95 : index
      %465 = memref.load %arg2[%c95] : memref<98xf32, #tpu.memory_space<smem>>
      %466 = vector.broadcast %465 : f32 to vector<1x256xf32>
      %467 = arith.mulf %466, %49 : vector<1x256xf32>
      %468 = arith.addf %464, %467 : vector<1x256xf32>
      %c96 = arith.constant 96 : index
      %469 = memref.load %arg2[%c96] : memref<98xf32, #tpu.memory_space<smem>>
      %470 = vector.broadcast %469 : f32 to vector<1x256xf32>
      %471 = arith.mulf %470, %52 : vector<1x256xf32>
      %472 = arith.addf %468, %471 : vector<1x256xf32>
      %c97 = arith.constant 97 : index
      %473 = memref.load %arg2[%c97] : memref<98xf32, #tpu.memory_space<smem>>
      %474 = vector.broadcast %473 : f32 to vector<1x256xf32>
      %475 = arith.mulf %474, %55 : vector<1x256xf32>
      %476 = arith.addf %472, %475 : vector<1x256xf32>
      %c208_i32 = arith.constant 208 : i32
      %477 = tpu.dynamic_rotate %476 by %c208_i32 dim 1 : vector<1x256xf32>, i32 -> vector<1x256xf32>
      %c13_67 = arith.constant 13 : index
      %c0_68 = arith.constant 0 : index
      %478 = vector.load %arg3[%c13_67, %c0_68] : memref<14x256xf32, #tpu.memory_space<vmem>>, vector<1x256xf32>
      %479 = arith.mulf %477, %478 : vector<1x256xf32>
      %480 = arith.addf %419, %479 : vector<1x256xf32>
      %481 = arith.negf %480 : vector<1x256xf32>
      %482 = math.exp %481 : vector<1x256xf32>
      %cst_69 = arith.constant 1.000000e+00 : f32
      %483 = vector.broadcast %cst_69 : f32 to vector<1x256xf32>
      %484 = arith.addf %483, %482 : vector<1x256xf32>
      %485 = arith.divf %483, %484 : vector<1x256xf32>
      %c0_70 = arith.constant 0 : index
      %c0_71 = arith.constant 0 : index
      %c0_72 = arith.constant 0 : index
      %486 = vector.load %arg5[%c0_70, %c0_71, %c0_72] : memref<1x1x256xf32, #tpu.memory_space<vmem>>, vector<1x1x256xf32>
      %487 = vector.shape_cast %486 : vector<1x1x256xf32> to vector<1x256xf32>
      %488 = vector.shape_cast %485 : vector<1x256xf32> to vector<1x1x256xf32>
      tpu.vector_store %arg5[%c0_70, %c0_71, %c0_72], %488 {strides = array<i32>} : memref<1x1x256xf32, #tpu.memory_space<vmem>>, vector<1x1x256xf32>,
    } else {
    }
    return
  }
  func.func @transform_0(%arg0: i32, %arg1: i32) -> i32 {
    %c0_i32 = arith.constant 0 : i32
    %c0_i32_0 = arith.constant 0 : i32
    return %c0_i32 : i32
  }
  func.func @transform_1(%arg0: i32, %arg1: i32) -> (i32, i32) {
    %c0_i32 = arith.constant 0 : i32
    %c0_i32_0 = arith.constant 0 : i32
    %c0_i32_1 = arith.constant 0 : i32
    return %c0_i32, %c0_i32_0 : i32, i32
  }
  func.func @transform_2(%arg0: i32, %arg1: i32) -> (i32, i32, i32) {
    %c0_i32 = arith.constant 0 : i32
    %c0_i32_0 = arith.constant 0 : i32
    return %arg0, %arg1, %c0_i32 : i32, i32, i32
  }
  func.func @transform_3(%arg0: i32, %arg1: i32) -> (i32, i32, i32) {
    %c0_i32 = arith.constant 0 : i32
    %c0_i32_0 = arith.constant 0 : i32
    %c0_i32_1 = arith.constant 0 : i32
    return %arg0, %c0_i32, %c0_i32_0 : i32, i32, i32
  }
}

</mosaic_0001>

<llo_original>
// kernel: tpu_custom_call.1
$region0: #{tpu_custom_call.1}
  #allocation0 [shape = 'u32[]', space=smem, size = 0x4, offset = 0x4, fixed_abs, tag = 'smem constant byte address 0x4 - core index']
  #allocation1 [shape = 'u32[72,128]{1,0:T(1,128)}', space=vmem, size = 0x9000, scoped, tag = 'internal scratch']
  #allocation2 [shape = 'f32[1,256]{1,0:T(1,128)}', space=vmem, size = 0x400, scoped, tag = 'scratch operand']
  #allocation3 [shape = 'f32[1,256]{1,0:T(1,128)}', space=vmem, size = 0x400, scoped, tag = 'scratch operand']
  %s0 = inlined_call_operand.hbm [shape: f32[98], index: 0, kind: input, shape index: {}]
  %s1 = inlined_call_operand.hbm [shape: f32[14,256], index: 1, kind: input, shape index: {}]
  %s2 = inlined_call_operand.hbm [shape: f32[2,4,256], index: 2, kind: input, shape index: {}]
  %s3 = inlined_call_operand.hbm [shape: f32[2,1,256], index: 3, kind: output, shape index: {}]
  %s4 = sld [smem:[#allocation0]]
  $region65: #{tpu_custom_call.1} parent=0
    _
  %s6 = ssub.s32 1, %s4
  %s7 = scalar_select 0, %s6, %s4
  $region1: #{tpu_custom_call.1} parent=0
    #allocation4 [shape = 'u8[512]{0}', space=smem, size = 0x200, scoped, tag = 'input window, operand 0, single buffered']
    #allocation5 [shape = 's32[2]{0}', space=sflag, size = 0x8, scoped, tag = 'scoped memory for tpu_custom_call.1']
    #allocation6 [shape = 's32[2]{0}', space=sflag, size = 0x8, scoped, tag = 'scoped memory for tpu_custom_call.1']
    #allocation7 [shape = 's32[2]{0}', space=sflag, size = 0x8, scoped, tag = 'scoped memory for tpu_custom_call.1']
    #allocation8 [shape = 'u8[16384]{0}', space=vmem, size = 0x4000, scoped, tag = 'input window, operand 1, single buffered']
    #allocation9 [shape = 'u8[8192]{0}', space=vmem, size = 0x2000, scoped, tag = 'input window, operand 2']
    #allocation10 [shape = 's32[2]{0}', space=sflag, size = 0x8, scoped, tag = 'scoped memory for tpu_custom_call.1']
    #allocation11 [shape = 'u8[2048]{0}', space=vmem, size = 0x800, scoped, tag = 'output window, operand 0']
    %8 = vsyncpa [#allocation7], 0
    %9 = vsyncpa [#allocation5], 0
    %10 = vsyncpa [#allocation10], 0
    %s11 = scalar_lea.sflag [#allocation10], 1
    %12 = vsyncpa %s11, 0
    %13 = vsyncpa [#allocation6], 0
    %s14 = scalar_lea.sflag [#allocation6], 1
    %15 = vsyncpa %s14, 0
    loop: start=0, step=1, limit=4
    $region2: #{tpu_custom_call.1} parent=1 // loop_pre_header
      _
    $region3: #{tpu_custom_call.1} parent=1 // loop_header
      %s17 = sphi 0, %s21
      %p18 = scmp.ge.s32.totalorder %s17, 4
      %s24 = sphi 0, %s36
      %s25 = sphi 0, %s32
      %s26 = sphi 0, %s24
      %s27 = sphi 0, %s25
      %s28 = sphi 0, %s26
      %s29 = sphi 0, %s27
      %s37 = sphi 0, %s37
      %s39 = sphi 0, %s37
      %s40 = sphi 0, %s39
      %s54 = sphi 0, %s40
      %s58 = sphi 0, %s58
      %s60 = sphi 0, %s58
      %s61 = sphi 0, %s60
      %s75 = sphi 0, %s61
      %s83 = sphi 0, %s85
      %s86 = sphi 0, %s83
      %s87 = sphi 0, %s86
      %s103 = sphi 0, %s87
      %s109 = sphi 0, %s111
      %s112 = sphi 0, %s109
      %s113 = sphi 0, %s112
      %s129 = sphi 0, %s113
    $region4: #{tpu_custom_call.1} parent=1 // loop_header_branch
      %20 = sbr.rel (%p18) target = $region8
    $region5: #{tpu_custom_call.1} parent=1 // loop_body
      %s22 = ssub.s32 %s17, 1
      %s23 = ssub.s32 %s17, 2
      %s30 = sadd.s32 1, %s25
      %p31 = scmp.ge.s32.totalorder %s30, 1
      %s32 = scalar_select %p31, 0, %s30
      %s33 = sadd.s32 1, %s24
      %s34 = scalar_select %p31, %s33, %s24
      %p35 = scmp.ge.s32.totalorder %s34, 2
      %s36 = scalar_select %p35, 0, %s34
      %s38 = sadd.s32 %s37, 1
      %p41 = scmp.eq.s32.totalorder %s17, 1
      %p42 = scmp.ne.s32.totalorder %s37, %s39
      %p43 = scmp.eq.s32.totalorder %s17, 0
      %p44 = por %p42, %p43
      %p45 = scmp.ne.s32.totalorder %s37, %s39
      %p46 = scmp.eq.s32.totalorder %s22, 1
      %p47 = por %p45, %p46
      %p48 = scmp.ne.s32.totalorder %s39, %s40
      %p49 = scmp.eq.s32.totalorder %s22, 0
      %p50 = por %p48, %p49
      %p51 = scmp.ne.s32.totalorder %s39, %s40
      %p52 = scmp.eq.s32.totalorder %s23, 1
      %p53 = por %p51, %p52
      %p55 = scmp.ne.s32.totalorder %s40, %s54
      %p56 = scmp.eq.s32.totalorder %s23, 0
      %p57 = por %p55, %p56
      %s59 = sadd.s32 %s58, 1
      %p62 = scmp.eq.s32.totalorder %s17, 1
      %p63 = scmp.ne.s32.totalorder %s58, %s60
      %p64 = scmp.eq.s32.totalorder %s17, 0
      %p65 = por %p63, %p64
      %p66 = scmp.ne.s32.totalorder %s58, %s60
      %p67 = scmp.eq.s32.totalorder %s22, 1
      %p68 = por %p66, %p67
      %p69 = scmp.ne.s32.totalorder %s60, %s61
      %p70 = scmp.eq.s32.totalorder %s22, 0
      %p71 = por %p69, %p70
      %p72 = scmp.ne.s32.totalorder %s60, %s61
      %p73 = scmp.eq.s32.totalorder %s23, 1
      %p74 = por %p72, %p73
      %p76 = scmp.ne.s32.totalorder %s61, %s75
      %p77 = scmp.eq.s32.totalorder %s23, 0
      %p78 = por %p76, %p77
      %s79 = ssub.s32 %s24, %s36
      %s80 = ssub.s32 %s25, %s32
      %s81 = sor.u32 %s79, %s80
      %p82 = scmp.eq.s32.totalorder %s81, 0
      %s84 = sadd.s32 %s83, 1
      %s85 = scalar_select %p82, %s83, %s84
      %p88 = pneg %p82
      %p89 = scmp.eq.s32.totalorder %s17, 1
      %p90 = por %p88, %p89
      %p91 = scmp.ne.s32.totalorder %s83, %s86
      %p92 = scmp.eq.s32.totalorder %s17, 0
      %p93 = por %p91, %p92
      %p94 = scmp.ne.s32.totalorder %s83, %s86
      %p95 = scmp.eq.s32.totalorder %s22, 1
      %p96 = por %p94, %p95
      %p97 = scmp.ne.s32.totalorder %s86, %s87
      %p98 = scmp.eq.s32.totalorder %s22, 0
      %p99 = por %p97, %p98
      %p100 = scmp.ne.s32.totalorder %s86, %s87
      %p101 = scmp.eq.s32.totalorder %s23, 1
      %p102 = por %p100, %p101
      %p104 = scmp.ne.s32.totalorder %s87, %s103
      %p105 = scmp.eq.s32.totalorder %s23, 0
      %p106 = por %p104, %p105
      %s107 = ssub.s32 %s24, %s36
      %p108 = scmp.eq.s32.totalorder %s107, 0
      %s110 = sadd.s32 %s109, 1
      %s111 = scalar_select %p108, %s109, %s110
      %p114 = pneg %p108
      %p115 = scmp.eq.s32.totalorder %s17, 1
      %p116 = por %p114, %p115
      %p117 = scmp.ne.s32.totalorder %s109, %s112
      %p118 = scmp.eq.s32.totalorder %s17, 0
      %p119 = por %p117, %p118
      %p120 = scmp.ne.s32.totalorder %s109, %s112
      %p121 = scmp.eq.s32.totalorder %s22, 1
      %p122 = por %p120, %p121
      %p123 = scmp.ne.s32.totalorder %s112, %s113
      %p124 = scmp.eq.s32.totalorder %s22, 0
      %p125 = por %p123, %p124
      %p126 = scmp.ne.s32.totalorder %s112, %s113
      %p127 = scmp.eq.s32.totalorder %s23, 1
      %p128 = por %p126, %p127
      %p130 = scmp.ne.s32.totalorder %s113, %s129
      %p131 = scmp.eq.s32.totalorder %s23, 0
      %p132 = por %p130, %p131
      %p133 = scmp.le.s32.totalorder 1, %s17
      %p134 = scmp.lt.s32.totalorder %s17, 3
      %p135 = pnand %p133, %p134
      %p136 = pneg %p135
      // Predicated region
      $region9: #{tpu_custom_call.1} parent=5 // pred_check
        _
      $region10: #{tpu_custom_call.1} parent=5 // pred_check_branch
        %138 = sbr.rel (%p135) target = $region12
      $region11: #{tpu_custom_call.1} parent=5 // pred_region
        %s139 = ssub.s32 %s17, 1
        // Predicated region
        $region13: #{tpu_custom_call.1} parent=11 // pred_check
          %p140 = pneg %p50
        $region14: #{tpu_custom_call.1} parent=11 // pred_check_branch
          %142 = sbr.rel (%p140) target = $region16
        $region15: #{tpu_custom_call.1} parent=11 // pred_region
          %144 = vsyncadd [#allocation7], 0
          %s146 = sshll.u32 %s0, 4
          %s147 = int_to_ptr.hbm [resolvable:$true] %s146
          %149 = dma.hbm_to_smem %s147, 16, [#allocation4], [#allocation7]
        $region16: #{tpu_custom_call.1} parent=11 // pred_fallthru
          _
        // Predicated region
        $region17: #{tpu_custom_call.1} parent=11 // pred_check
          %p150 = pneg %p71
        $region18: #{tpu_custom_call.1} parent=11 // pred_check_branch
          %152 = sbr.rel (%p150) target = $region20
        $region19: #{tpu_custom_call.1} parent=11 // pred_region
          %154 = vsyncadd [#allocation5], 0
          %s155 = sshll.u32 %s1, 4
          %s156 = int_to_ptr.hbm [resolvable:$true] %s155
          %s157 = sshll.u32 [#allocation8], 4
          %s158 = int_to_ptr.vmem [resolvable:$true] %s157
          %163 = dma.hbm_to_vmem [thread:$0]  %s156, 512, %s158, [#allocation5], 256, 256, 16
        $region20: #{tpu_custom_call.1} parent=11 // pred_fallthru
          _
      $region12: #{tpu_custom_call.1} parent=5 // pred_fallthru
        _
      %p164 = scmp.lt.s32.totalorder %s17, 2
      // Predicated region
      $region21: #{tpu_custom_call.1} parent=5 // pred_check
        %p165 = pneg %p164
      $region22: #{tpu_custom_call.1} parent=5 // pred_check_branch
        %167 = sbr.rel (%p165) target = $region24
      $region23: #{tpu_custom_call.1} parent=5 // pred_region
        // Predicated region
        $region25: #{tpu_custom_call.1} parent=23 // pred_check
          %p168 = pneg %p93
        $region26: #{tpu_custom_call.1} parent=23 // pred_check_branch
          %170 = sbr.rel (%p168) target = $region28
        $region27: #{tpu_custom_call.1} parent=23 // pred_region
          %s171 = sand.u32 %s83, 1
          %s172 = scalar_lea.sflag [#allocation10], %s171
          %s173 = sand.u32 %s83, 1
          %s174 = smul.addr %s173, 8
          %s175 = scalar_lea.vmem [#allocation9], %s174
          %177 = vsyncadd %s172, 0
          %s178 = smul.addr %s25, 2
          %s179 = smul.addr %s24, 2
          %s180 = sadd.s32 %s178, %s179
          %s181 = smul.addr %s180, 4
          %s182 = scalar_lea.hbm %s2, %s181
          %s184 = sshll.u32 %s182, 4
          %s185 = int_to_ptr.hbm [resolvable:$true] %s184
          %s186 = sshll.u32 %s175, 4
          %s187 = int_to_ptr.vmem [resolvable:$true] %s186
          %189 = dma.hbm_to_vmem [thread:$0]  %s185, 128, %s187, %s172
        $region28: #{tpu_custom_call.1} parent=23 // pred_fallthru
          _
      $region24: #{tpu_custom_call.1} parent=5 // pred_fallthru
        _
      %p190 = scmp.le.s32.totalorder 1, %s17
      %p191 = scmp.lt.s32.totalorder %s17, 3
      %p192 = pnand %p190, %p191
      %p193 = pneg %p192
      // Predicated region
      $region29: #{tpu_custom_call.1} parent=5 // pred_check
        _
      $region30: #{tpu_custom_call.1} parent=5 // pred_check_branch
        %195 = sbr.rel (%p192) target = $region32
      $region31: #{tpu_custom_call.1} parent=5 // pred_region
        %s196 = ssub.s32 %s17, 1
        // Predicated region
        $region33: #{tpu_custom_call.1} parent=31 // pred_check
          %p197 = pneg %p50
        $region34: #{tpu_custom_call.1} parent=31 // pred_check_branch
          %199 = sbr.rel (%p197) target = $region36
        $region35: #{tpu_custom_call.1} parent=31 // pred_region
          %201 = dma.done [#allocation7], 16
        $region36: #{tpu_custom_call.1} parent=31 // pred_fallthru
          _
        // Predicated region
        $region37: #{tpu_custom_call.1} parent=31 // pred_check
          %p202 = pneg %p71
        $region38: #{tpu_custom_call.1} parent=31 // pred_check_branch
          %204 = sbr.rel (%p202) target = $region40
        $region39: #{tpu_custom_call.1} parent=31 // pred_region
          %206 = dma.done [#allocation5], 512
        $region40: #{tpu_custom_call.1} parent=31 // pred_fallthru
          _
        %s207 = sand.u32 %s86, 1
        %s208 = scalar_lea.sflag [#allocation10], %s207
        %s209 = sand.u32 %s86, 1
        %s210 = smul.addr %s209, 8
        %s211 = scalar_lea.vmem [#allocation9], %s210
        // Predicated region
        $region41: #{tpu_custom_call.1} parent=31 // pred_check
          %p212 = pneg %p99
        $region42: #{tpu_custom_call.1} parent=31 // pred_check_branch
          %214 = sbr.rel (%p212) target = $region44
        $region43: #{tpu_custom_call.1} parent=31 // pred_region
          %216 = dma.done %s208, 128
        $region44: #{tpu_custom_call.1} parent=31 // pred_fallthru
          _
        %217 = sfence
        %p218 = pneg %p50
        %p219 = pneg %p47
        %p220 = pneg %p71
        %p221 = pneg %p68
        %s222 = sand.u32 %s86, 1
        %s223 = scalar_lea.sflag [#allocation10], %s222
        %s224 = sand.u32 %s86, 1
        %s225 = smul.addr %s224, 8
        %s226 = scalar_lea.vmem [#allocation9], %s225
        %p227 = pneg %p99
        %p228 = pneg %p96
        %p229 = pneg %p125
        %p230 = pneg %p122
        %s231 = sand.u32 %s112, 1
        %s232 = scalar_lea.sflag [#allocation6], %s231
        %s233 = sand.u32 %s112, 1
        %s234 = smul.addr %s233, 2
        %s235 = scalar_lea.vmem [#allocation11], %s234
        %p236 = scmp.eq.s32.totalorder %s27, 0
        // Predicated region
        $region45: #{tpu_custom_call.1} parent=31 // pred_check
          %p237 = pneg %p236
        $region46: #{tpu_custom_call.1} parent=31 // pred_check_branch
          %239 = sbr.rel (%p237) target = $region48
        $region47: #{tpu_custom_call.1} parent=31 // pred_region
          %v240 = vlaneseq
          %vm241 = vcmp.ge.s32.totalorder %v240, 0
          %vm242 = vcmp.lt.s32.totalorder %v240, 256
          %vm243 = vmand %vm241, %vm242
          %244 = vst.msk [vmem:[#allocation2] sm:$0x3] %vm243, 0.0
          %245 = vst.msk [vmem:[#allocation3] sm:$0x3] %vm243, -inf
        $region48: #{tpu_custom_call.1} parent=31 // pred_fallthru
          _
        %v246 = vld [vmem:[%s211] sm:$0xff]
        %v247 = vld [vmem:[#allocation2] sm:$0x3]
        %249 = vst [vmem:[#allocation1] ss:$2 sm:$0xff] %v246
        %v250 = vld.sshfl [vmem:[#allocation1] sm:$0xff pattern:$0x75316420]
        %v251 = vld.sshfl [vmem:[#allocation1 + $0x8] sm:$0xff pattern:$0x75316420]
        %vm254 = vcmask 1043456
        %v255 = vsel %vm254, %v250, 0.0
        %v256 = vrot.slane %v255, 4
        %v257 = vadd.f32 %v255, %v256
        %v258 = vrot.slane %v257, 2
        %v259 = vadd.f32 %v257, %v258
        %v260 = vrot.slane %v259, 1
        %v261 = vadd.f32 %v259, %v260
        %v262 = vsel %vm254, %v251, 0.0
        %v263 = vrot.slane %v262, 4
        %v264 = vadd.f32 %v262, %v263
        %v265 = vrot.slane %v264, 2
        %v266 = vadd.f32 %v264, %v265
        %v267 = vrot.slane %v266, 1
        %v268 = vadd.f32 %v266, %v267
        %v271 = vrot.slane %v268, 7
        %vm272 = vcmask 1040384
        %v273 = vsel %vm272, %v261, %v271
        %v275 = vadd.f32 %v247, %v273
        %v276 = vlaneseq
        %vm277 = vcmp.ge.s32.totalorder %v276, 0
        %vm278 = vcmp.lt.s32.totalorder %v276, 256
        %vm279 = vmand %vm277, %vm278
        %280 = vst.msk [vmem:[#allocation2] sm:$0x3] %vm279, %v275
        %v281 = vld [vmem:[#allocation3] sm:$0x3]
        %282 = vst [vmem:[#allocation1] ss:$2 sm:$0xff] %v246
        %v283 = vld.sshfl [vmem:[#allocation1] sm:$0xff pattern:$0x75316420]
        %v284 = vld.sshfl [vmem:[#allocation1 + $0x8] sm:$0xff pattern:$0x75316420]
        %v287 = vsel %vm254, %v283, -inf
        %v288 = vrot.slane %v287, 4
        %v289 = vmax.f32 %v287, %v288
        %v290 = vrot.slane %v289, 2
        %v291 = vmax.f32 %v289, %v290
        %v292 = vrot.slane %v291, 1
        %v293 = vmax.f32 %v291, %v292
        %v294 = vsel %vm254, %v284, -inf
        %v295 = vrot.slane %v294, 4
        %v296 = vmax.f32 %v294, %v295
        %v297 = vrot.slane %v296, 2
        %v298 = vmax.f32 %v296, %v297
        %v299 = vrot.slane %v298, 1
        %v300 = vmax.f32 %v298, %v299
        %v303 = vrot.slane %v300, 7
        %v304 = vsel %vm272, %v293, %v303
        %v306 = vmax.f32 %v281, %v304
        %307 = vst.msk [vmem:[#allocation3] sm:$0x3] %vm279, %v306
        // Predicated region
        $region49: #{tpu_custom_call.1} parent=31 // pred_check
          %p308 = pneg %p236
        $region50: #{tpu_custom_call.1} parent=31 // pred_check_branch
          %310 = sbr.rel (%p308) target = $region52
        $region51: #{tpu_custom_call.1} parent=31 // pred_region
          %v311 = vld [vmem:[#allocation2] sm:$0x3]
          %v312 = vld [vmem:[#allocation3] sm:$0x3]
          %v314 = vperm.slane %v311, 0
          %v315 = vperm.slane %v311, 1
          %318 = vrot.lane.b32.xlu0 %v314, 3
          %v319 = vpop.permute.xlu0 %318
          %320 = vrot.lane.b32.xlu0 %v315, 3
          %v321 = vpop.permute.xlu0 %320
          %v322 = vlaneseq
          %v323 = vand.u32 %v322, 127
          %vm324 = vcmp.lt.s32.totalorder %v323, 3
          %v325 = vsel %vm324, %v319, %v321
          %v326 = vsel %vm324, %v321, %v319
          %v327 = vld [vmem:[#allocation8] ss:$8 sm:$0x3]
          %v329 = vperm.slane %v327, 0
          %v330 = vperm.slane %v327, 1
          %v333 = vmul.f32 %v326, %v329
          %v334 = vmul.f32 %v325, %v330
          %335 = vrot.lane.b32.xlu0 %v314, 2
          %v336 = vpop.permute.xlu0 %335
          %337 = vrot.lane.b32.xlu0 %v315, 2
          %v338 = vpop.permute.xlu0 %337
          %vm339 = vcmp.lt.s32.totalorder %v323, 2
          %v340 = vsel %vm339, %v336, %v338
          %v341 = vsel %vm339, %v338, %v336
          %s342 = scalar_lea.vmem [#allocation8], 1
          %v343 = vld [vmem:[%s342] ss:$8 sm:$0x3]
          %v345 = vperm.slane %v343, 0
          %v346 = vperm.slane %v343, 1
          %v349 = vmul.f32 %v341, %v345
          %v350 = vmul.f32 %v340, %v346
          %351 = vrot.lane.b32.xlu0 %v314, 1
          %v352 = vpop.permute.xlu0 %351
          %353 = vrot.lane.b32.xlu0 %v315, 1
          %v354 = vpop.permute.xlu0 %353
          %vm355 = vcmp.lt.s32.totalorder %v323, 1
          %v356 = vsel %vm355, %v352, %v354
          %v357 = vsel %vm355, %v354, %v352
          %s358 = scalar_lea.vmem [#allocation8], 2
          %v359 = vld [vmem:[%s358] ss:$8 sm:$0x3]
          %v361 = vperm.slane %v359, 0
          %v362 = vperm.slane %v359, 1
          %v365 = vmul.f32 %v357, %v361
          %v366 = vmul.f32 %v356, %v362
          %367 = vrot.lane.b32.xlu0 %v314, 127
          %v368 = vpop.permute.xlu0 %367
          %369 = vrot.lane.b32.xlu0 %v315, 127
          %v370 = vpop.permute.xlu0 %369
          %vm371 = vcmp.lt.s32.totalorder %v323, 127
          %v372 = vsel %vm371, %v368, %v370
          %v373 = vsel %vm371, %v370, %v368
          %s374 = scalar_lea.vmem [#allocation8], 4
          %v375 = vld [vmem:[%s374] ss:$8 sm:$0x3]
          %v377 = vperm.slane %v375, 0
          %v378 = vperm.slane %v375, 1
          %v381 = vmul.f32 %v372, %v377
          %v382 = vmul.f32 %v373, %v378
          %383 = vrot.lane.b32.xlu0 %v314, 126
          %v384 = vpop.permute.xlu0 %383
          %385 = vrot.lane.b32.xlu0 %v315, 126
          %v386 = vpop.permute.xlu0 %385
          %vm387 = vcmp.lt.s32.totalorder %v323, 126
          %v388 = vsel %vm387, %v384, %v386
          %v389 = vsel %vm387, %v386, %v384
          %s390 = scalar_lea.vmem [#allocation8], 5
          %v391 = vld [vmem:[%s390] ss:$8 sm:$0x3]
          %v393 = vperm.slane %v391, 0
          %v394 = vperm.slane %v391, 1
          %v397 = vmul.f32 %v388, %v393
          %v398 = vmul.f32 %v389, %v394
          %399 = vrot.lane.b32.xlu0 %v314, 125
          %v400 = vpop.permute.xlu0 %399
          %401 = vrot.lane.b32.xlu0 %v315, 125
          %v402 = vpop.permute.xlu0 %401
          %vm403 = vcmp.lt.s32.totalorder %v323, 125
          %v404 = vsel %vm403, %v400, %v402
          %v405 = vsel %vm403, %v402, %v400
          %s406 = scalar_lea.vmem [#allocation8], 6
          %v407 = vld [vmem:[%s406] ss:$8 sm:$0x3]
          %v409 = vperm.slane %v407, 0
          %v410 = vperm.slane %v407, 1
          %v413 = vmul.f32 %v404, %v409
          %v414 = vmul.f32 %v405, %v410
          %v416 = vperm.slane %v312, 0
          %v417 = vperm.slane %v312, 1
          %420 = vrot.lane.b32.xlu0 %v416, 3
          %v421 = vpop.permute.xlu0 %420
          %422 = vrot.lane.b32.xlu0 %v417, 3
          %v423 = vpop.permute.xlu0 %422
          %v424 = vsel %vm324, %v421, %v423
          %v425 = vsel %vm324, %v423, %v421
          %v426 = vmul.f32 %v425, %v329
          %v427 = vmul.f32 %v424, %v330
          %428 = vrot.lane.b32.xlu0 %v416, 2
          %v429 = vpop.permute.xlu0 %428
          %430 = vrot.lane.b32.xlu0 %v417, 2
          %v431 = vpop.permute.xlu0 %430
          %v432 = vsel %vm339, %v429, %v431
          %v433 = vsel %vm339, %v431, %v429
          %v434 = vmul.f32 %v433, %v345
          %v435 = vmul.f32 %v432, %v346
          %436 = vrot.lane.b32.xlu0 %v416, 1
          %v437 = vpop.permute.xlu0 %436
          %438 = vrot.lane.b32.xlu0 %v417, 1
          %v439 = vpop.permute.xlu0 %438
          %v440 = vsel %vm355, %v437, %v439
          %v441 = vsel %vm355, %v439, %v437
          %v442 = vmul.f32 %v441, %v361
          %v443 = vmul.f32 %v440, %v362
          %444 = vrot.lane.b32.xlu0 %v416, 127
          %v445 = vpop.permute.xlu0 %444
          %446 = vrot.lane.b32.xlu0 %v417, 127
          %v447 = vpop.permute.xlu0 %446
          %v448 = vsel %vm371, %v445, %v447
          %v449 = vsel %vm371, %v447, %v445
          %v450 = vmul.f32 %v448, %v377
          %v451 = vmul.f32 %v449, %v378
          %452 = vrot.lane.b32.xlu0 %v416, 126
          %v453 = vpop.permute.xlu0 %452
          %454 = vrot.lane.b32.xlu0 %v417, 126
          %v455 = vpop.permute.xlu0 %454
          %v456 = vsel %vm387, %v453, %v455
          %v457 = vsel %vm387, %v455, %v453
          %v458 = vmul.f32 %v456, %v393
          %v459 = vmul.f32 %v457, %v394
          %460 = vrot.lane.b32.xlu0 %v416, 125
          %v461 = vpop.permute.xlu0 %460
          %462 = vrot.lane.b32.xlu0 %v417, 125
          %v463 = vpop.permute.xlu0 %462
          %v464 = vsel %vm403, %v461, %v463
          %v465 = vsel %vm403, %v463, %v461
          %v466 = vmul.f32 %v464, %v409
          %v467 = vmul.f32 %v465, %v410
          %s468 = sld [smem:[#allocation4]]
          %v469 = vstv %s468
          %v470 = vmul.f32 %v469, %v333
          %v471 = vmul.f32 %v469, %v334
          %v472 = vadd.f32 %v470, 0.0
          %v473 = vadd.f32 %v471, 0.0
          %s474 = sld [smem:[#allocation4 + $0x1]]
          %v475 = vstv %s474
          %v476 = vmul.f32 %v475, %v349
          %v477 = vmul.f32 %v475, %v350
          %v478 = vadd.f32 %v472, %v476
          %v479 = vadd.f32 %v473, %v477
          %s480 = sld [smem:[#allocation4 + $0x2]]
          %v481 = vstv %s480
          %v482 = vmul.f32 %v481, %v365
          %v483 = vmul.f32 %v481, %v366
          %v484 = vadd.f32 %v478, %v482
          %v485 = vadd.f32 %v479, %v483
          %s486 = sld [smem:[#allocation4 + $0x3]]
          %v487 = vstv %s486
          %v488 = vmul.f32 %v487, %v311
          %v490 = vperm.slane %v488, 0
          %v491 = vperm.slane %v488, 1
          %v494 = vadd.f32 %v484, %v490
          %v495 = vadd.f32 %v485, %v491
          %s496 = sld [smem:[#allocation4 + $0x4]]
          %v497 = vstv %s496
          %v498 = vmul.f32 %v497, %v381
          %v499 = vmul.f32 %v497, %v382
          %v500 = vadd.f32 %v494, %v498
          %v501 = vadd.f32 %v495, %v499
          %s502 = sld [smem:[#allocation4 + $0x5]]
          %v503 = vstv %s502
          %v504 = vmul.f32 %v503, %v397
          %v505 = vmul.f32 %v503, %v398
          %v506 = vadd.f32 %v500, %v504
          %v507 = vadd.f32 %v501, %v505
          %s508 = sld [smem:[#allocation4 + $0x6]]
          %v509 = vstv %s508
          %v510 = vmul.f32 %v509, %v413
          %v511 = vmul.f32 %v509, %v414
          %v512 = vadd.f32 %v506, %v510
          %v513 = vadd.f32 %v507, %v511
          %s514 = sld [smem:[#allocation4 + $0x31]]
          %v515 = vstv %s514
          %v516 = vmul.f32 %v515, %v426
          %v517 = vmul.f32 %v515, %v427
          %v518 = vadd.f32 %v512, %v516
          %v519 = vadd.f32 %v513, %v517
          %s520 = sld [smem:[#allocation4 + $0x32]]
          %v521 = vstv %s520
          %v522 = vmul.f32 %v521, %v434
          %v523 = vmul.f32 %v521, %v435
          %v524 = vadd.f32 %v518, %v522
          %v525 = vadd.f32 %v519, %v523
          %s526 = sld [smem:[#allocation4 + $0x33]]
          %v527 = vstv %s526
          %v528 = vmul.f32 %v527, %v442
          %v529 = vmul.f32 %v527, %v443
          %v530 = vadd.f32 %v524, %v528
          %v531 = vadd.f32 %v525, %v529
          %s532 = sld [smem:[#allocation4 + $0x34]]
          %v533 = vstv %s532
          %v534 = vmul.f32 %v533, %v312
          %v536 = vperm.slane %v534, 0
          %v537 = vperm.slane %v534, 1
          %v540 = vadd.f32 %v530, %v536
          %v541 = vadd.f32 %v531, %v537
          %s542 = sld [smem:[#allocation4 + $0x35]]
          %v543 = vstv %s542
          %v544 = vmul.f32 %v543, %v450
          %v545 = vmul.f32 %v543, %v451
          %v546 = vadd.f32 %v540, %v544
          %v547 = vadd.f32 %v541, %v545
          %s548 = sld [smem:[#allocation4 + $0x36]]
          %v549 = vstv %s548
          %v550 = vmul.f32 %v549, %v458
          %v551 = vmul.f32 %v549, %v459
          %v552 = vadd.f32 %v546, %v550
          %v553 = vadd.f32 %v547, %v551
          %s554 = sld [smem:[#allocation4 + $0x37]]
          %v555 = vstv %s554
          %v556 = vmul.f32 %v555, %v466
          %v557 = vmul.f32 %v555, %v467
          %v558 = vadd.f32 %v552, %v556
          %v559 = vadd.f32 %v553, %v557
          %560 = vrot.lane.b32.xlu0 %v558, 48
          %v561 = vpop.permute.xlu0 %560
          %562 = vrot.lane.b32.xlu0 %v559, 48
          %v563 = vpop.permute.xlu0 %562
          %vm564 = vcmp.lt.s32.totalorder %v323, 48
          %v565 = vsel %vm564, %v561, %v563
          %v566 = vsel %vm564, %v563, %v561
          %s567 = scalar_lea.vmem [#allocation8], 7
          %v568 = vld [vmem:[%s567] ss:$8 sm:$0x3]
          %v570 = vperm.slane %v568, 0
          %v571 = vperm.slane %v568, 1
          %v574 = vmul.f32 %v566, %v570
          %v575 = vmul.f32 %v565, %v571
          %v576 = vadd.f32 %v574, 0.0
          %v577 = vadd.f32 %v575, 0.0
          %s578 = sld [smem:[#allocation4 + $0x7]]
          %v579 = vstv %s578
          %v580 = vmul.f32 %v579, %v333
          %v581 = vmul.f32 %v579, %v334
          %v582 = vadd.f32 %v580, 0.0
          %v583 = vadd.f32 %v581, 0.0
          %s584 = sld [smem:[#allocation4 + $0x8]]
          %v585 = vstv %s584
          %v586 = vmul.f32 %v585, %v349
          %v587 = vmul.f32 %v585, %v350
          %v588 = vadd.f32 %v582, %v586
          %v589 = vadd.f32 %v583, %v587
          %s590 = sld [smem:[#allocation4 + $0x9]]
          %v591 = vstv %s590
          %v592 = vmul.f32 %v591, %v365
          %v593 = vmul.f32 %v591, %v366
          %v594 = vadd.f32 %v588, %v592
          %v595 = vadd.f32 %v589, %v593
          %s596 = sld [smem:[#allocation4 + $0xa]]
          %v597 = vstv %s596
          %v598 = vmul.f32 %v597, %v311
          %v600 = vperm.slane %v598, 0
          %v601 = vperm.slane %v598, 1
          %v604 = vadd.f32 %v594, %v600
          %v605 = vadd.f32 %v595, %v601
          %s606 = sld [smem:[#allocation4 + $0xb]]
          %v607 = vstv %s606
          %v608 = vmul.f32 %v607, %v381
          %v609 = vmul.f32 %v607, %v382
          %v610 = vadd.f32 %v604, %v608
          %v611 = vadd.f32 %v605, %v609
          %s612 = sld [smem:[#allocation4 + $0xc]]
          %v613 = vstv %s612
          %v614 = vmul.f32 %v613, %v397
          %v615 = vmul.f32 %v613, %v398
          %v616 = vadd.f32 %v610, %v614
          %v617 = vadd.f32 %v611, %v615
          %s618 = sld [smem:[#allocation4 + $0xd]]
          %v619 = vstv %s618
          %v620 = vmul.f32 %v619, %v413
          %v621 = vmul.f32 %v619, %v414
          %v622 = vadd.f32 %v616, %v620
          %v623 = vadd.f32 %v617, %v621
          %s624 = sld [smem:[#allocation4 + $0x38]]
          %v625 = vstv %s624
          %v626 = vmul.f32 %v625, %v426
          %v627 = vmul.f32 %v625, %v427
          %v628 = vadd.f32 %v622, %v626
          %v629 = vadd.f32 %v623, %v627
          %s630 = sld [smem:[#allocation4 + $0x39]]
          %v631 = vstv %s630
          %v632 = vmul.f32 %v631, %v434
          %v633 = vmul.f32 %v631, %v435
          %v634 = vadd.f32 %v628, %v632
          %v635 = vadd.f32 %v629, %v633
          %s636 = sld [smem:[#allocation4 + $0x3a]]
          %v637 = vstv %s636
          %v638 = vmul.f32 %v637, %v442
          %v639 = vmul.f32 %v637, %v443
          %v640 = vadd.f32 %v634, %v638
          %v641 = vadd.f32 %v635, %v639
          %s642 = sld [smem:[#allocation4 + $0x3b]]
          %v643 = vstv %s642
          %v644 = vmul.f32 %v643, %v312
          %v646 = vperm.slane %v644, 0
          %v647 = vperm.slane %v644, 1
          %v650 = vadd.f32 %v640, %v646
          %v651 = vadd.f32 %v641, %v647
          %s652 = sld [smem:[#allocation4 + $0x3c]]
          %v653 = vstv %s652
          %v654 = vmul.f32 %v653, %v450
          %v655 = vmul.f32 %v653, %v451
          %v656 = vadd.f32 %v650, %v654
          %v657 = vadd.f32 %v651, %v655
          %s658 = sld [smem:[#allocation4 + $0x3d]]
          %v659 = vstv %s658
          %v660 = vmul.f32 %v659, %v458
          %v661 = vmul.f32 %v659, %v459
          %v662 = vadd.f32 %v656, %v660
          %v663 = vadd.f32 %v657, %v661
          %s664 = sld [smem:[#allocation4 + $0x3e]]
          %v665 = vstv %s664
          %v666 = vmul.f32 %v665, %v466
          %v667 = vmul.f32 %v665, %v467
          %v668 = vadd.f32 %v662, %v666
          %v669 = vadd.f32 %v663, %v667
          %670 = vrot.lane.b32.xlu0 %v668, 32
          %v671 = vpop.permute.xlu0 %670
          %672 = vrot.lane.b32.xlu0 %v669, 32
          %v673 = vpop.permute.xlu0 %672
          %vm674 = vcmp.lt.s32.totalorder %v323, 32
          %v675 = vsel %vm674, %v671, %v673
          %v676 = vsel %vm674, %v673, %v671
          %s677 = scalar_lea.vmem [#allocation8], 16
          %v678 = vld [vmem:[%s677] ss:$8 sm:$0x3]
          %v680 = vperm.slane %v678, 0
          %v681 = vperm.slane %v678, 1
          %v684 = vmul.f32 %v676, %v680
          %v685 = vmul.f32 %v675, %v681
          %v686 = vadd.f32 %v576, %v684
          %v687 = vadd.f32 %v577, %v685
          %s688 = sld [smem:[#allocation4 + $0xe]]
          %v689 = vstv %s688
          %v690 = vmul.f32 %v689, %v333
          %v691 = vmul.f32 %v689, %v334
          %v692 = vadd.f32 %v690, 0.0
          %v693 = vadd.f32 %v691, 0.0
          %s694 = sld [smem:[#allocation4 + $0xf]]
          %v695 = vstv %s694
          %v696 = vmul.f32 %v695, %v349
          %v697 = vmul.f32 %v695, %v350
          %v698 = vadd.f32 %v692, %v696
          %v699 = vadd.f32 %v693, %v697
          %s700 = sld [smem:[#allocation4 + $0x10]]
          %v701 = vstv %s700
          %v702 = vmul.f32 %v701, %v365
          %v703 = vmul.f32 %v701, %v366
          %v704 = vadd.f32 %v698, %v702
          %v705 = vadd.f32 %v699, %v703
          %s706 = sld [smem:[#allocation4 + $0x11]]
          %v707 = vstv %s706
          %v708 = vmul.f32 %v707, %v311
          %v710 = vperm.slane %v708, 0
          %v711 = vperm.slane %v708, 1
          %v714 = vadd.f32 %v704, %v710
          %v715 = vadd.f32 %v705, %v711
          %s716 = sld [smem:[#allocation4 + $0x12]]
          %v717 = vstv %s716
          %v718 = vmul.f32 %v717, %v381
          %v719 = vmul.f32 %v717, %v382
          %v720 = vadd.f32 %v714, %v718
          %v721 = vadd.f32 %v715, %v719
          %s722 = sld [smem:[#allocation4 + $0x13]]
          %v723 = vstv %s722
          %v724 = vmul.f32 %v723, %v397
          %v725 = vmul.f32 %v723, %v398
          %v726 = vadd.f32 %v720, %v724
          %v727 = vadd.f32 %v721, %v725
          %s728 = sld [smem:[#allocation4 + $0x14]]
          %v729 = vstv %s728
          %v730 = vmul.f32 %v729, %v413
          %v731 = vmul.f32 %v729, %v414
          %v732 = vadd.f32 %v726, %v730
          %v733 = vadd.f32 %v727, %v731
          %s734 = sld [smem:[#allocation4 + $0x3f]]
          %v735 = vstv %s734
          %v736 = vmul.f32 %v735, %v426
          %v737 = vmul.f32 %v735, %v427
          %v738 = vadd.f32 %v732, %v736
          %v739 = vadd.f32 %v733, %v737
          %s740 = sld [smem:[#allocation4 + $0x40]]
          %v741 = vstv %s740
          %v742 = vmul.f32 %v741, %v434
          %v743 = vmul.f32 %v741, %v435
          %v744 = vadd.f32 %v738, %v742
          %v745 = vadd.f32 %v739, %v743
          %s746 = sld [smem:[#allocation4 + $0x41]]
          %v747 = vstv %s746
          %v748 = vmul.f32 %v747, %v442
          %v749 = vmul.f32 %v747, %v443
          %v750 = vadd.f32 %v744, %v748
          %v751 = vadd.f32 %v745, %v749
          %s752 = sld [smem:[#allocation4 + $0x42]]
          %v753 = vstv %s752
          %v754 = vmul.f32 %v753, %v312
          %v756 = vperm.slane %v754, 0
          %v757 = vperm.slane %v754, 1
          %v760 = vadd.f32 %v750, %v756
          %v761 = vadd.f32 %v751, %v757
          %s762 = sld [smem:[#allocation4 + $0x43]]
          %v763 = vstv %s762
          %v764 = vmul.f32 %v763, %v450
          %v765 = vmul.f32 %v763, %v451
          %v766 = vadd.f32 %v760, %v764
          %v767 = vadd.f32 %v761, %v765
          %s768 = sld [smem:[#allocation4 + $0x44]]
          %v769 = vstv %s768
          %v770 = vmul.f32 %v769, %v458
          %v771 = vmul.f32 %v769, %v459
          %v772 = vadd.f32 %v766, %v770
          %v773 = vadd.f32 %v767, %v771
          %s774 = sld [smem:[#allocation4 + $0x45]]
          %v775 = vstv %s774
          %v776 = vmul.f32 %v775, %v466
          %v777 = vmul.f32 %v775, %v467
          %v778 = vadd.f32 %v772, %v776
          %v779 = vadd.f32 %v773, %v777
          %780 = vrot.lane.b32.xlu0 %v778, 16
          %v781 = vpop.permute.xlu0 %780
          %782 = vrot.lane.b32.xlu0 %v779, 16
          %v783 = vpop.permute.xlu0 %782
          %vm784 = vcmp.lt.s32.totalorder %v323, 16
          %v785 = vsel %vm784, %v781, %v783
          %v786 = vsel %vm784, %v783, %v781
          %s787 = scalar_lea.vmem [#allocation8], 17
          %v788 = vld [vmem:[%s787] ss:$8 sm:$0x3]
          %v790 = vperm.slane %v788, 0
          %v791 = vperm.slane %v788, 1
          %v794 = vmul.f32 %v786, %v790
          %v795 = vmul.f32 %v785, %v791
          %v796 = vadd.f32 %v686, %v794
          %v797 = vadd.f32 %v687, %v795
          %s798 = sld [smem:[#allocation4 + $0x15]]
          %v799 = vstv %s798
          %v800 = vmul.f32 %v799, %v333
          %v801 = vmul.f32 %v799, %v334
          %v802 = vadd.f32 %v800, 0.0
          %v803 = vadd.f32 %v801, 0.0
          %s804 = sld [smem:[#allocation4 + $0x16]]
          %v805 = vstv %s804
          %v806 = vmul.f32 %v805, %v349
          %v807 = vmul.f32 %v805, %v350
          %v808 = vadd.f32 %v802, %v806
          %v809 = vadd.f32 %v803, %v807
          %s810 = sld [smem:[#allocation4 + $0x17]]
          %v811 = vstv %s810
          %v812 = vmul.f32 %v811, %v365
          %v813 = vmul.f32 %v811, %v366
          %v814 = vadd.f32 %v808, %v812
          %v815 = vadd.f32 %v809, %v813
          %s816 = sld [smem:[#allocation4 + $0x18]]
          %v817 = vstv %s816
          %v818 = vmul.f32 %v817, %v311
          %v820 = vperm.slane %v818, 0
          %v821 = vperm.slane %v818, 1
          %v824 = vadd.f32 %v814, %v820
          %v825 = vadd.f32 %v815, %v821
          %s826 = sld [smem:[#allocation4 + $0x19]]
          %v827 = vstv %s826
          %v828 = vmul.f32 %v827, %v381
          %v829 = vmul.f32 %v827, %v382
          %v830 = vadd.f32 %v824, %v828
          %v831 = vadd.f32 %v825, %v829
          %s832 = sld [smem:[#allocation4 + $0x1a]]
          %v833 = vstv %s832
          %v834 = vmul.f32 %v833, %v397
          %v835 = vmul.f32 %v833, %v398
          %v836 = vadd.f32 %v830, %v834
          %v837 = vadd.f32 %v831, %v835
          %s838 = sld [smem:[#allocation4 + $0x1b]]
          %v839 = vstv %s838
          %v840 = vmul.f32 %v839, %v413
          %v841 = vmul.f32 %v839, %v414
          %v842 = vadd.f32 %v836, %v840
          %v843 = vadd.f32 %v837, %v841
          %s844 = sld [smem:[#allocation4 + $0x46]]
          %v845 = vstv %s844
          %v846 = vmul.f32 %v845, %v426
          %v847 = vmul.f32 %v845, %v427
          %v848 = vadd.f32 %v842, %v846
          %v849 = vadd.f32 %v843, %v847
          %s850 = sld [smem:[#allocation4 + $0x47]]
          %v851 = vstv %s850
          %v852 = vmul.f32 %v851, %v434
          %v853 = vmul.f32 %v851, %v435
          %v854 = vadd.f32 %v848, %v852
          %v855 = vadd.f32 %v849, %v853
          %s856 = sld [smem:[#allocation4 + $0x48]]
          %v857 = vstv %s856
          %v858 = vmul.f32 %v857, %v442
          %v859 = vmul.f32 %v857, %v443
          %v860 = vadd.f32 %v854, %v858
          %v861 = vadd.f32 %v855, %v859
          %s862 = sld [smem:[#allocation4 + $0x49]]
          %v863 = vstv %s862
          %v864 = vmul.f32 %v863, %v312
          %v866 = vperm.slane %v864, 0
          %v867 = vperm.slane %v864, 1
          %v870 = vadd.f32 %v860, %v866
          %v871 = vadd.f32 %v861, %v867
          %s872 = sld [smem:[#allocation4 + $0x4a]]
          %v873 = vstv %s872
          %v874 = vmul.f32 %v873, %v450
          %v875 = vmul.f32 %v873, %v451
          %v876 = vadd.f32 %v870, %v874
          %v877 = vadd.f32 %v871, %v875
          %s878 = sld [smem:[#allocation4 + $0x4b]]
          %v879 = vstv %s878
          %v880 = vmul.f32 %v879, %v458
          %v881 = vmul.f32 %v879, %v459
          %v882 = vadd.f32 %v876, %v880
          %v883 = vadd.f32 %v877, %v881
          %s884 = sld [smem:[#allocation4 + $0x4c]]
          %v885 = vstv %s884
          %v886 = vmul.f32 %v885, %v466
          %v887 = vmul.f32 %v885, %v467
          %v888 = vadd.f32 %v882, %v886
          %v889 = vadd.f32 %v883, %v887
          %v890 = vadd.f32 %v796, %v888
          %v891 = vadd.f32 %v797, %v889
          %s892 = sld [smem:[#allocation4 + $0x1c]]
          %v893 = vstv %s892
          %v894 = vmul.f32 %v893, %v333
          %v895 = vmul.f32 %v893, %v334
          %v896 = vadd.f32 %v894, 0.0
          %v897 = vadd.f32 %v895, 0.0
          %s898 = sld [smem:[#allocation4 + $0x1d]]
          %v899 = vstv %s898
          %v900 = vmul.f32 %v899, %v349
          %v901 = vmul.f32 %v899, %v350
          %v902 = vadd.f32 %v896, %v900
          %v903 = vadd.f32 %v897, %v901
          %s904 = sld [smem:[#allocation4 + $0x1e]]
          %v905 = vstv %s904
          %v906 = vmul.f32 %v905, %v365
          %v907 = vmul.f32 %v905, %v366
          %v908 = vadd.f32 %v902, %v906
          %v909 = vadd.f32 %v903, %v907
          %s910 = sld [smem:[#allocation4 + $0x1f]]
          %v911 = vstv %s910
          %v912 = vmul.f32 %v911, %v311
          %v914 = vperm.slane %v912, 0
          %v915 = vperm.slane %v912, 1
          %v918 = vadd.f32 %v908, %v914
          %v919 = vadd.f32 %v909, %v915
          %s920 = sld [smem:[#allocation4 + $0x20]]
          %v921 = vstv %s920
          %v922 = vmul.f32 %v921, %v381
          %v923 = vmul.f32 %v921, %v382
          %v924 = vadd.f32 %v918, %v922
          %v925 = vadd.f32 %v919, %v923
          %s926 = sld [smem:[#allocation4 + $0x21]]
          %v927 = vstv %s926
          %v928 = vmul.f32 %v927, %v397
          %v929 = vmul.f32 %v927, %v398
          %v930 = vadd.f32 %v924, %v928
          %v931 = vadd.f32 %v925, %v929
          %s932 = sld [smem:[#allocation4 + $0x22]]
          %v933 = vstv %s932
          %v934 = vmul.f32 %v933, %v413
          %v935 = vmul.f32 %v933, %v414
          %v936 = vadd.f32 %v930, %v934
          %v937 = vadd.f32 %v931, %v935
          %s938 = sld [smem:[#allocation4 + $0x4d]]
          %v939 = vstv %s938
          %v940 = vmul.f32 %v939, %v426
          %v941 = vmul.f32 %v939, %v427
          %v942 = vadd.f32 %v936, %v940
          %v943 = vadd.f32 %v937, %v941
          %s944 = sld [smem:[#allocation4 + $0x4e]]
          %v945 = vstv %s944
          %v946 = vmul.f32 %v945, %v434
          %v947 = vmul.f32 %v945, %v435
          %v948 = vadd.f32 %v942, %v946
          %v949 = vadd.f32 %v943, %v947
          %s950 = sld [smem:[#allocation4 + $0x4f]]
          %v951 = vstv %s950
          %v952 = vmul.f32 %v951, %v442
          %v953 = vmul.f32 %v951, %v443
          %v954 = vadd.f32 %v948, %v952
          %v955 = vadd.f32 %v949, %v953
          %s956 = sld [smem:[#allocation4 + $0x50]]
          %v957 = vstv %s956
          %v958 = vmul.f32 %v957, %v312
          %v960 = vperm.slane %v958, 0
          %v961 = vperm.slane %v958, 1
          %v964 = vadd.f32 %v954, %v960
          %v965 = vadd.f32 %v955, %v961
          %s966 = sld [smem:[#allocation4 + $0x51]]
          %v967 = vstv %s966
          %v968 = vmul.f32 %v967, %v450
          %v969 = vmul.f32 %v967, %v451
          %v970 = vadd.f32 %v964, %v968
          %v971 = vadd.f32 %v965, %v969
          %s972 = sld [smem:[#allocation4 + $0x52]]
          %v973 = vstv %s972
          %v974 = vmul.f32 %v973, %v458
          %v975 = vmul.f32 %v973, %v459
          %v976 = vadd.f32 %v970, %v974
          %v977 = vadd.f32 %v971, %v975
          %s978 = sld [smem:[#allocation4 + $0x53]]
          %v979 = vstv %s978
          %v980 = vmul.f32 %v979, %v466
          %v981 = vmul.f32 %v979, %v467
          %v982 = vadd.f32 %v976, %v980
          %v983 = vadd.f32 %v977, %v981
          %984 = vrot.lane.b32.xlu0 %v982, 112
          %v985 = vpop.permute.xlu0 %984
          %986 = vrot.lane.b32.xlu0 %v983, 112
          %v987 = vpop.permute.xlu0 %986
          %vm988 = vcmp.lt.s32.totalorder %v323, 112
          %v989 = vsel %vm988, %v985, %v987
          %v990 = vsel %vm988, %v987, %v985
          %s991 = scalar_lea.vmem [#allocation8], 19
          %v992 = vld [vmem:[%s991] ss:$8 sm:$0x3]
          %v994 = vperm.slane %v992, 0
          %v995 = vperm.slane %v992, 1
          %v998 = vmul.f32 %v989, %v994
          %v999 = vmul.f32 %v990, %v995
          %v1000 = vadd.f32 %v890, %v998
          %v1001 = vadd.f32 %v891, %v999
          %s1002 = sld [smem:[#allocation4 + $0x23]]
          %v1003 = vstv %s1002
          %v1004 = vmul.f32 %v1003, %v333
          %v1005 = vmul.f32 %v1003, %v334
          %v1006 = vadd.f32 %v1004, 0.0
          %v1007 = vadd.f32 %v1005, 0.0
          %s1008 = sld [smem:[#allocation4 + $0x24]]
          %v1009 = vstv %s1008
          %v1010 = vmul.f32 %v1009, %v349
          %v1011 = vmul.f32 %v1009, %v350
          %v1012 = vadd.f32 %v1006, %v1010
          %v1013 = vadd.f32 %v1007, %v1011
          %s1014 = sld [smem:[#allocation4 + $0x25]]
          %v1015 = vstv %s1014
          %v1016 = vmul.f32 %v1015, %v365
          %v1017 = vmul.f32 %v1015, %v366
          %v1018 = vadd.f32 %v1012, %v1016
          %v1019 = vadd.f32 %v1013, %v1017
          %s1020 = sld [smem:[#allocation4 + $0x26]]
          %v1021 = vstv %s1020
          %v1022 = vmul.f32 %v1021, %v311
          %v1024 = vperm.slane %v1022, 0
          %v1025 = vperm.slane %v1022, 1
          %v1028 = vadd.f32 %v1018, %v1024
          %v1029 = vadd.f32 %v1019, %v1025
          %s1030 = sld [smem:[#allocation4 + $0x27]]
          %v1031 = vstv %s1030
          %v1032 = vmul.f32 %v1031, %v381
          %v1033 = vmul.f32 %v1031, %v382
          %v1034 = vadd.f32 %v1028, %v1032
          %v1035 = vadd.f32 %v1029, %v1033
          %s1036 = sld [smem:[#allocation4 + $0x28]]
          %v1037 = vstv %s1036
          %v1038 = vmul.f32 %v1037, %v397
          %v1039 = vmul.f32 %v1037, %v398
          %v1040 = vadd.f32 %v1034, %v1038
          %v1041 = vadd.f32 %v1035, %v1039
          %s1042 = sld [smem:[#allocation4 + $0x29]]
          %v1043 = vstv %s1042
          %v1044 = vmul.f32 %v1043, %v413
          %v1045 = vmul.f32 %v1043, %v414
          %v1046 = vadd.f32 %v1040, %v1044
          %v1047 = vadd.f32 %v1041, %v1045
          %s1048 = sld [smem:[#allocation4 + $0x54]]
          %v1049 = vstv %s1048
          %v1050 = vmul.f32 %v1049, %v426
          %v1051 = vmul.f32 %v1049, %v427
          %v1052 = vadd.f32 %v1046, %v1050
          %v1053 = vadd.f32 %v1047, %v1051
          %s1054 = sld [smem:[#allocation4 + $0x55]]
          %v1055 = vstv %s1054
          %v1056 = vmul.f32 %v1055, %v434
          %v1057 = vmul.f32 %v1055, %v435
          %v1058 = vadd.f32 %v1052, %v1056
          %v1059 = vadd.f32 %v1053, %v1057
          %s1060 = sld [smem:[#allocation4 + $0x56]]
          %v1061 = vstv %s1060
          %v1062 = vmul.f32 %v1061, %v442
          %v1063 = vmul.f32 %v1061, %v443
          %v1064 = vadd.f32 %v1058, %v1062
          %v1065 = vadd.f32 %v1059, %v1063
          %s1066 = sld [smem:[#allocation4 + $0x57]]
          %v1067 = vstv %s1066
          %v1068 = vmul.f32 %v1067, %v312
          %v1070 = vperm.slane %v1068, 0
          %v1071 = vperm.slane %v1068, 1
          %v1074 = vadd.f32 %v1064, %v1070
          %v1075 = vadd.f32 %v1065, %v1071
          %s1076 = sld [smem:[#allocation4 + $0x58]]
          %v1077 = vstv %s1076
          %v1078 = vmul.f32 %v1077, %v450
          %v1079 = vmul.f32 %v1077, %v451
          %v1080 = vadd.f32 %v1074, %v1078
          %v1081 = vadd.f32 %v1075, %v1079
          %s1082 = sld [smem:[#allocation4 + $0x59]]
          %v1083 = vstv %s1082
          %v1084 = vmul.f32 %v1083, %v458
          %v1085 = vmul.f32 %v1083, %v459
          %v1086 = vadd.f32 %v1080, %v1084
          %v1087 = vadd.f32 %v1081, %v1085
          %s1088 = sld [smem:[#allocation4 + $0x5a]]
          %v1089 = vstv %s1088
          %v1090 = vmul.f32 %v1089, %v466
          %v1091 = vmul.f32 %v1089, %v467
          %v1092 = vadd.f32 %v1086, %v1090
          %v1093 = vadd.f32 %v1087, %v1091
          %1094 = vrot.lane.b32.xlu0 %v1092, 96
          %v1095 = vpop.permute.xlu0 %1094
          %1096 = vrot.lane.b32.xlu0 %v1093, 96
          %v1097 = vpop.permute.xlu0 %1096
          %vm1098 = vcmp.lt.s32.totalorder %v323, 96
          %v1099 = vsel %vm1098, %v1095, %v1097
          %v1100 = vsel %vm1098, %v1097, %v1095
          %s1101 = scalar_lea.vmem [#allocation8], 20
          %v1102 = vld [vmem:[%s1101] ss:$8 sm:$0x3]
          %v1104 = vperm.slane %v1102, 0
          %v1105 = vperm.slane %v1102, 1
          %v1108 = vmul.f32 %v1099, %v1104
          %v1109 = vmul.f32 %v1100, %v1105
          %v1110 = vadd.f32 %v1000, %v1108
          %v1111 = vadd.f32 %v1001, %v1109
          %s1112 = sld [smem:[#allocation4 + $0x2a]]
          %v1113 = vstv %s1112
          %v1114 = vmul.f32 %v1113, %v333
          %v1115 = vmul.f32 %v1113, %v334
          %v1116 = vadd.f32 %v1114, 0.0
          %v1117 = vadd.f32 %v1115, 0.0
          %s1118 = sld [smem:[#allocation4 + $0x2b]]
          %v1119 = vstv %s1118
          %v1120 = vmul.f32 %v1119, %v349
          %v1121 = vmul.f32 %v1119, %v350
          %v1122 = vadd.f32 %v1116, %v1120
          %v1123 = vadd.f32 %v1117, %v1121
          %s1124 = sld [smem:[#allocation4 + $0x2c]]
          %v1125 = vstv %s1124
          %v1126 = vmul.f32 %v1125, %v365
          %v1127 = vmul.f32 %v1125, %v366
          %v1128 = vadd.f32 %v1122, %v1126
          %v1129 = vadd.f32 %v1123, %v1127
          %s1130 = sld [smem:[#allocation4 + $0x2d]]
          %v1131 = vstv %s1130
          %v1132 = vmul.f32 %v1131, %v311
          %v1134 = vperm.slane %v1132, 0
          %v1135 = vperm.slane %v1132, 1
          %v1138 = vadd.f32 %v1128, %v1134
          %v1139 = vadd.f32 %v1129, %v1135
          %s1140 = sld [smem:[#allocation4 + $0x2e]]
          %v1141 = vstv %s1140
          %v1142 = vmul.f32 %v1141, %v381
          %v1143 = vmul.f32 %v1141, %v382
          %v1144 = vadd.f32 %v1138, %v1142
          %v1145 = vadd.f32 %v1139, %v1143
          %s1146 = sld [smem:[#allocation4 + $0x2f]]
          %v1147 = vstv %s1146
          %v1148 = vmul.f32 %v1147, %v397
          %v1149 = vmul.f32 %v1147, %v398
          %v1150 = vadd.f32 %v1144, %v1148
          %v1151 = vadd.f32 %v1145, %v1149
          %s1152 = sld [smem:[#allocation4 + $0x30]]
          %v1153 = vstv %s1152
          %v1154 = vmul.f32 %v1153, %v413
          %v1155 = vmul.f32 %v1153, %v414
          %v1156 = vadd.f32 %v1150, %v1154
          %v1157 = vadd.f32 %v1151, %v1155
          %s1158 = sld [smem:[#allocation4 + $0x5b]]
          %v1159 = vstv %s1158
          %v1160 = vmul.f32 %v1159, %v426
          %v1161 = vmul.f32 %v1159, %v427
          %v1162 = vadd.f32 %v1156, %v1160
          %v1163 = vadd.f32 %v1157, %v1161
          %s1164 = sld [smem:[#allocation4 + $0x5c]]
          %v1165 = vstv %s1164
          %v1166 = vmul.f32 %v1165, %v434
          %v1167 = vmul.f32 %v1165, %v435
          %v1168 = vadd.f32 %v1162, %v1166
          %v1169 = vadd.f32 %v1163, %v1167
          %s1170 = sld [smem:[#allocation4 + $0x5d]]
          %v1171 = vstv %s1170
          %v1172 = vmul.f32 %v1171, %v442
          %v1173 = vmul.f32 %v1171, %v443
          %v1174 = vadd.f32 %v1168, %v1172
          %v1175 = vadd.f32 %v1169, %v1173
          %s1176 = sld [smem:[#allocation4 + $0x5e]]
          %v1177 = vstv %s1176
          %v1178 = vmul.f32 %v1177, %v312
          %v1180 = vperm.slane %v1178, 0
          %v1181 = vperm.slane %v1178, 1
          %v1184 = vadd.f32 %v1174, %v1180
          %v1185 = vadd.f32 %v1175, %v1181
          %s1186 = sld [smem:[#allocation4 + $0x5f]]
          %v1187 = vstv %s1186
          %v1188 = vmul.f32 %v1187, %v450
          %v1189 = vmul.f32 %v1187, %v451
          %v1190 = vadd.f32 %v1184, %v1188
          %v1191 = vadd.f32 %v1185, %v1189
          %s1192 = sld [smem:[#allocation4 + $0x60]]
          %v1193 = vstv %s1192
          %v1194 = vmul.f32 %v1193, %v458
          %v1195 = vmul.f32 %v1193, %v459
          %v1196 = vadd.f32 %v1190, %v1194
          %v1197 = vadd.f32 %v1191, %v1195
          %s1198 = sld [smem:[#allocation4 + $0x61]]
          %v1199 = vstv %s1198
          %v1200 = vmul.f32 %v1199, %v466
          %v1201 = vmul.f32 %v1199, %v467
          %v1202 = vadd.f32 %v1196, %v1200
          %v1203 = vadd.f32 %v1197, %v1201
          %1204 = vrot.lane.b32.xlu0 %v1202, 80
          %v1205 = vpop.permute.xlu0 %1204
          %1206 = vrot.lane.b32.xlu0 %v1203, 80
          %v1207 = vpop.permute.xlu0 %1206
          %vm1208 = vcmp.lt.s32.totalorder %v323, 80
          %v1209 = vsel %vm1208, %v1205, %v1207
          %v1210 = vsel %vm1208, %v1207, %v1205
          %s1211 = scalar_lea.vmem [#allocation8], 21
          %v1212 = vld [vmem:[%s1211] ss:$8 sm:$0x3]
          %v1214 = vperm.slane %v1212, 0
          %v1215 = vperm.slane %v1212, 1
          %v1218 = vmul.f32 %v1209, %v1214
          %v1219 = vmul.f32 %v1210, %v1215
          %v1220 = vadd.f32 %v1110, %v1218
          %v1221 = vadd.f32 %v1111, %v1219
          %v1222 = vxor.u32 %v1220, 2147483648
          %v1223 = vxor.u32 %v1221, 2147483648
          %v1224 = vmul.f32 %v1222, 1.442695
          %v1225 = vpow.pop %v1224
          %v1226 = vmul.f32 %v1223, 1.442695
          %v1227 = vpow.pop %v1226
          %v1228 = vadd.f32 %v1225, 1.0
          %v1229 = vadd.f32 %v1227, 1.0
          %v1230 = vrcp.pop %v1228
          %v1231 = vmul.f32 %v1228, %v1230
          %v1232 = vsub.f32 1.0, %v1231
          %v1233 = vmul.f32 %v1230, %v1232
          %v1234 = vadd.f32 %v1230, %v1233
          %vm1235 = vweird.f32 %v1228
          %vm1236 = vweird.f32 %v1230
          %vm1237 = vmor %vm1235, %vm1236
          %v1238 = vsel %vm1237, %v1230, %v1234
          %v1239 = vand.u32 2147483647, %v1228
          %vm1240 = vcmp.eq.f32.partialorder %v1239, 8.507059e+37
          %v1241 = vand.u32 %v1228, 2147483648
          %v1242 = vor.u32 1.1754944e-38, %v1241
          %v1243 = vsel %vm1240, %v1242, %v1238
          %v1244 = vmul.f32 1.0, %v1243
          %v1245 = vrcp.pop %v1229
          %v1246 = vmul.f32 %v1229, %v1245
          %v1247 = vsub.f32 1.0, %v1246
          %v1248 = vmul.f32 %v1245, %v1247
          %v1249 = vadd.f32 %v1245, %v1248
          %vm1250 = vweird.f32 %v1229
          %vm1251 = vweird.f32 %v1245
          %vm1252 = vmor %vm1250, %vm1251
          %v1253 = vsel %vm1252, %v1245, %v1249
          %v1254 = vand.u32 2147483647, %v1229
          %vm1255 = vcmp.eq.f32.partialorder %v1254, 8.507059e+37
          %v1256 = vand.u32 %v1229, 2147483648
          %v1257 = vor.u32 1.1754944e-38, %v1256
          %v1258 = vsel %vm1255, %v1257, %v1253
          %v1259 = vmul.f32 1.0, %v1258
          %v1262 = vrot.slane %v1259, 7
          %v1263 = vsel %vm272, %v1244, %v1262
          %1265 = vst.msk [vmem:[%s235] sm:$0x3] %vm279, %v1263
        $region52: #{tpu_custom_call.1} parent=31 // pred_fallthru
          _
        %s1266 = sand.u32 %s112, 1
        %s1267 = scalar_lea.sflag [#allocation6], %s1266
        %s1268 = sand.u32 %s112, 1
        %s1269 = smul.addr %s1268, 2
        %s1270 = scalar_lea.vmem [#allocation11], %s1269
        // Predicated region
        $region53: #{tpu_custom_call.1} parent=31 // pred_check
          %p1271 = pneg %p122
        $region54: #{tpu_custom_call.1} parent=31 // pred_check_branch
          %1273 = sbr.rel (%p1271) target = $region56
        $region55: #{tpu_custom_call.1} parent=31 // pred_region
          %1275 = vsyncadd %s1267, 0
          %s1276 = smul.addr %s26, 2
          %s1277 = scalar_lea.hbm %s3, %s1276
          %s1279 = sshll.u32 %s1270, 4
          %s1280 = int_to_ptr.vmem [resolvable:$true] %s1279
          %s1281 = sshll.u32 %s1277, 4
          %s1282 = int_to_ptr.hbm [resolvable:$true] %s1281
          %1284 = dma.vmem_to_hbm [thread:$0]  %s1280, 32, %s1282, %s1267
        $region56: #{tpu_custom_call.1} parent=31 // pred_fallthru
          _
      $region32: #{tpu_custom_call.1} parent=5 // pred_fallthru
        _
      %p1285 = scmp.le.s32.totalorder 2, %s17
      // Predicated region
      $region57: #{tpu_custom_call.1} parent=5 // pred_check
        %p1286 = pneg %p1285
      $region58: #{tpu_custom_call.1} parent=5 // pred_check_branch
        %1288 = sbr.rel (%p1286) target = $region60
      $region59: #{tpu_custom_call.1} parent=5 // pred_region
        %s1289 = ssub.s32 %s17, 2
        // Predicated region
        $region61: #{tpu_custom_call.1} parent=59 // pred_check
          %p1290 = pneg %p128
        $region62: #{tpu_custom_call.1} parent=59 // pred_check_branch
          %1292 = sbr.rel (%p1290) target = $region64
        $region63: #{tpu_custom_call.1} parent=59 // pred_region
          %s1293 = sand.u32 %s113, 1
          %s1294 = scalar_lea.sflag [#allocation6], %s1293
          %s1295 = sand.u32 %s113, 1
          %s1296 = smul.addr %s1295, 2
          %s1297 = scalar_lea.vmem [#allocation11], %s1296
          %1299 = dma.done %s1294, 32
        $region64: #{tpu_custom_call.1} parent=59 // pred_fallthru
          _
      $region60: #{tpu_custom_call.1} parent=5 // pred_fallthru
        _
    $region6: #{tpu_custom_call.1} parent=1 // loop_footer
      %s21 = sadd.s32 1, %s17
    $region7: #{tpu_custom_call.1} parent=1 // loop_footer_branch
      %16 = sbr.rel target = $region3
    $region8: #{tpu_custom_call.1} parent=1 // loop_exit
      _
    %1300 = vsyncpa [#allocation5], 1
    %s1301 = scalar_lea.sflag [#allocation5], 1
    %1302 = vsyncpa %s1301, 1
    %1303 = vsyncpa [#allocation10], 1
    %s1304 = scalar_lea.sflag [#allocation10], 1
    %1305 = vsyncpa %s1304, 1
    %1306 = vsyncpa [#allocation6], 1
    %s1307 = scalar_lea.sflag [#allocation6], 1
    %1308 = vsyncpa %s1307, 1
    %1309 = vsyncpa [#allocation7], 1
    %s1310 = scalar_lea.sflag [#allocation7], 1
    %1311 = vsyncpa %s1310, 1

</llo_original>
